<compile_context>
chip_gen: v7x
topology: tpu7x:2x2x1
jax: 0.10.0
libtpu: 0.0.40
codegen_flags: <defaults>
</compile_context>

<pallas_src>
import functools

import jax
import jax.numpy as jnp
from jax.experimental import pallas as pl
from jax.experimental.pallas import tpu as pltpu

# ---- small, self-consistent shapes ------------------------------------------
BATCH = 2
SEQ_LEN = 128            # per-grid-step M = 128 (fills v5e MXU, decent on v6e)
EMBED_DIM = 128          # "embed_dim" (BERT hidden size) — lane-dense
NUM_FILTERS = 128        # "num_filters"
FILTER_SIZES = (3, 4, 5)
FS_MAX = max(FILTER_SIZES)
NF_TOTAL = NUM_FILTERS * len(FILTER_SIZES)
L_PAD = ((SEQ_LEN + FS_MAX - 1 + 7) // 8) * 8   # seq + conv halo, sublane aligned
VOCAB = 100
TYPE_VOCAB = 2
LN_EPS = 1e-12


# ---- fused Pallas kernel -----------------------------------------------------
def textcnn_fused_kernel(e_ref, ln_ref, w_ref, hp_ref, fcb_ref, o_ref, *,
                         seq_len, num_f, filter_sizes):
    """LayerNorm + Conv1d(3/4/5) + bias + ReLU + max-over-time + Linear, fused.

    e_ref  : (1, L_PAD, D) f32  embedding sum for this batch row (halo rows are
                                don't-care: they only meet zero-padded taps or
                                masked output positions)
    ln_ref : (2, D)        f32  [gamma; beta] of the LayerNorm stand-in
    w_ref  : (FS_MAX, D, 3F) bf16 fused conv weights, tap-major, zero taps
                                beyond each bank's filter size
    hp_ref : (2, 3F)       f32  [conv bias; final Linear weight]
    fcb_ref: (1, 1)        f32  final Linear bias (SMEM)
    o_ref  : (1, 8, 128)   f32  regression output broadcast over the block
    """
    fs_max = max(filter_sizes)
    nf_total = num_f * len(filter_sizes)

    # ---- LayerNorm over the feature (lane) dim, f32 --------------------------
    h = e_ref[0]                                              # (L_PAD, D)
    mu = jnp.mean(h, axis=-1, keepdims=True)
    xc = h - mu
    var = jnp.mean(xc * xc, axis=-1, keepdims=True)
    hn = xc * jax.lax.rsqrt(var + LN_EPS) * ln_ref[0:1, :] + ln_ref[1:2, :]

    # ---- Conv1d bank: FS_MAX shifted MXU matmuls, f32 accumulation -----------
    # s[t, :] = sum_k hidden[t+k, :] @ W[k]  (W[k] zero for taps past each fs)
    acc = jnp.zeros((seq_len, nf_total), jnp.float32)
    for k in range(fs_max):
        acc += jnp.dot(hn[k:k + seq_len, :].astype(jnp.bfloat16), w_ref[k],
                       preferred_element_type=jnp.float32)

    s = jnp.maximum(acc + hp_ref[0:1, :], 0.0)                # bias + ReLU (VPU)

    # ---- mask conv positions past each bank's valid length (L - fs + 1) ------
    # Two iota compares, no lane concatenation (layout-free).
    row = jax.lax.broadcasted_iota(jnp.int32, (seq_len, nf_total), 0)
    chan = jax.lax.broadcasted_iota(jnp.int32, (seq_len, nf_total), 1)
    valid = jnp.zeros((seq_len, nf_total), jnp.int32)
    for i, fs in enumerate(filter_sizes):
        valid = jnp.where((chan >= i * num_f) & (chan < (i + 1) * num_f),
                          seq_len - fs + 1, valid)
    s = jnp.where(row < valid, s, -jnp.inf)                   # robust pre-max mask

    # ---- max over time; channels of all banks already lane-adjacent ----------
    pooled = jnp.max(s, axis=0, keepdims=True)                # (1, 3F)

    # ---- final Linear(3F -> 1): VPU multiply + lane reduction -----------------
    out = jnp.sum(pooled * hp_ref[1:2, :], axis=1, keepdims=True) + fcb_ref[0, 0]
    o_ref[...] = jnp.broadcast_to(out.reshape(1, 1, 1), o_ref.shape)


def textcnn_head(e_pad, ln_p, conv_w, head_p, fc_b, *, batch, seq_len, num_f,
                 filter_sizes):
    """e_pad: (B, L_PAD, D) f32 -> (B,) f32, one grid step per batch row."""
    _, l_pad, d = e_pad.shape
    nf_total = num_f * len(filter_sizes)
    fs_max = max(filter_sizes)
    kernel = functools.partial(textcnn_fused_kernel, seq_len=seq_len,
                               num_f=num_f, filter_sizes=filter_sizes)
    out3 = pl.pallas_call(
        kernel,
        out_shape=jax.ShapeDtypeStruct((batch, 8, 128), jnp.float32),
        grid_spec=pltpu.PrefetchScalarGridSpec(
            num_scalar_prefetch=0,
            grid=(batch,),
            in_specs=[
                pl.BlockSpec((1, l_pad, d), lambda b: (b, 0, 0)),
                pl.BlockSpec((2, d), lambda b: (0, 0)),
                # constant index_map -> conv weight stays VMEM-resident
                pl.BlockSpec((fs_max, d, nf_total), lambda b: (0, 0, 0)),
                pl.BlockSpec((2, nf_total), lambda b: (0, 0)),
                pl.BlockSpec(memory_space=pltpu.MemorySpace.SMEM),
            ],
            out_specs=pl.BlockSpec((1, 8, 128), lambda b: (b, 0, 0)),
        ),
        compiler_params=pltpu.CompilerParams(
            dimension_semantics=("parallel",)),   # shards batch across v7x TCs
    )(e_pad, ln_p, conv_w, head_p, fc_b)
    return out3[:, 0, 0]                                       # (B,)


# ---- glue (plain JAX): parameters + BERT stand-in ----------------------------
def init_params(key):
    ks = jax.random.split(key, 10)
    d, f = EMBED_DIM, NUM_FILTERS
    params = {
        # BERT-embedding-style stand-in parameters
        "word_emb": 0.02 * jax.random.normal(ks[0], (VOCAB, d), jnp.float32),
        "type_emb": 0.02 * jax.random.normal(ks[1], (TYPE_VOCAB, d), jnp.float32),
        "pos_emb": 0.02 * jax.random.normal(ks[2], (SEQ_LEN, d), jnp.float32),
        "ln_params": jnp.stack([jnp.ones((d,), jnp.float32),
                                jnp.zeros((d,), jnp.float32)], axis=0),  # (2, D)
        "fc_b": jnp.zeros((1, 1), jnp.float32),
    }
    # Fused conv bank: PyTorch Conv1d weight (F, D, fs) -> tap-major (fs, D, F),
    # zero-pad taps to FS_MAX, concat banks along output channels -> (5, D, 3F).
    w_blocks, b_blocks = [], []
    for i, fs in enumerate(FILTER_SIZES):
        w = 0.02 * jax.random.normal(ks[3 + 2 * i], (fs, d, f), jnp.float32)
        b = 0.01 * jax.random.normal(ks[4 + 2 * i], (f,), jnp.float32)
        w_blocks.append(jnp.pad(w, ((0, FS_MAX - fs), (0, 0), (0, 0))))
        b_blocks.append(b)
    params["conv_w_cat"] = jnp.concatenate(w_blocks, axis=2).astype(jnp.bfloat16)
    conv_b = jnp.concatenate(b_blocks, axis=0)[None, :]                 # (1, 3F)
    fc_w = 0.02 * jax.random.normal(ks[9], (1, NF_TOTAL), jnp.float32)  # (1, 3F)
    params["head_params"] = jnp.concatenate([conv_b, fc_w], axis=0)     # (2, 3F)
    return params


def bert_embedding_sum(params, input_ids, token_type_ids):
    # TODO(synk): the full pretrained BERT encoder (self-attention stack) cannot
    # be reproduced in-script; a BERT-style embedding sum stands in for
    # outputs.last_hidden_state (its LayerNorm is fused into the Pallas kernel).
    return (params["word_emb"][input_ids]
            + params["type_emb"][token_type_ids]
            + params["pos_emb"][None, :, :])


@jax.jit
def bert_textcnn_forward(params, input_ids, token_type_ids, attention_mask):
    del attention_mask   # only feeds the real BERT encoder (stand-in here)
    e = bert_embedding_sum(params, input_ids, token_type_ids)   # (B, L, D) f32
    b, l, _ = e.shape
    # Small zero halo so in-kernel tap slices stay in bounds; halo rows only
    # ever meet zero-padded taps or masked output positions.
    e_pad = jnp.pad(e, ((0, 0), (0, L_PAD - l), (0, 0)))
    out = textcnn_head(e_pad, params["ln_params"], params["conv_w_cat"],
                       params["head_params"], params["fc_b"],
                       batch=b, seq_len=l, num_f=NUM_FILTERS,
                       filter_sizes=FILTER_SIZES)
    # nn.Dropout(0.3) is identity at inference (module.eval()); squeeze(1) done
    # by returning (B,).
    return out


@jax.jit
def reference_forward(params, input_ids, token_type_ids):
    """Pure-JAX reference of the same forward (f32 activations)."""
    e = bert_embedding_sum(params, input_ids, token_type_ids)
    mu = jnp.mean(e, -1, keepdims=True)
    var = jnp.mean((e - mu) ** 2, -1, keepdims=True)
    h = ((e - mu) * jax.lax.rsqrt(var + LN_EPS) * params["ln_params"][0]
         + params["ln_params"][1])                                   # (B, L, D)
    w = params["conv_w_cat"].astype(jnp.float32)                      # (5, D, 3F)
    conv_b, fc_w = params["head_params"][0], params["head_params"][1]
    pooled_banks = []
    b_, l_, _ = h.shape
    for i, fs in enumerate(FILTER_SIZES):
        wi = w[:fs, :, i * NUM_FILTERS:(i + 1) * NUM_FILTERS]
        bi = conv_b[i * NUM_FILTERS:(i + 1) * NUM_FILTERS]
        outs = jnp.zeros((b_, l_ - fs + 1, NUM_FILTERS), jnp.float32)
        for k in range(fs):
            outs = outs + jnp.einsum("bld,df->blf",
                                     h[:, k:k + l_ - fs + 1, :], wi[k])
        pooled_banks.append(jnp.max(jnp.maximum(outs + bi, 0.0), axis=1))
    pooled = jnp.concatenate(pooled_banks, axis=1)                    # (B, 3F)
    return jnp.sum(pooled * fc_w[None, :], axis=1) + params["fc_b"][0, 0]


if __name__ == "__main__":
    key = jax.random.PRNGKey(0)
    k_param, k_ids = jax.random.split(key)
    params = init_params(k_param)

    input_ids = jax.random.randint(k_ids, (BATCH, SEQ_LEN), 0, VOCAB, jnp.int32)
    token_type_ids = jnp.zeros((BATCH, SEQ_LEN), jnp.int32)
    attention_mask = jnp.ones((BATCH, SEQ_LEN), jnp.int32)

    out = bert_textcnn_forward(params, input_ids, token_type_ids, attention_mask)
    jax.block_until_ready(out)
    assert out.shape == (BATCH,) and out.dtype == jnp.float32
    assert bool(jnp.all(jnp.isfinite(out)))

    ref = reference_forward(params, input_ids, token_type_ids)
    assert bool(jnp.allclose(out, ref, atol=3e-2, rtol=3e-2)), (out, ref)
    print("KERNEL_OK")
</pallas_src>

<mosaic_0001>
module attributes {stable_mosaic.version = 11 : i64} {
  func.func @textcnn_fused_kernel(%arg0: i32, %arg1: memref<1x136x128xf32, #tpu.memory_space<vmem>>, %arg2: memref<2x128xf32, #tpu.memory_space<vmem>>, %arg3: memref<5x128x384xbf16, #tpu.memory_space<vmem>>, %arg4: memref<2x384xf32, #tpu.memory_space<vmem>>, %arg5: memref<1x1xf32, #tpu.memory_space<smem>>, %arg6: memref<1x8x128xf32, #tpu.memory_space<vmem>>) attributes {dimension_semantics = [#tpu.dimension_semantics<parallel>], iteration_bounds = array<i64: 2>, scalar_prefetch = 0 : i64, scratch_operands = 0 : i64, tpu.core_type = #tpu.core_type<tc>, window_params = [{transform_indices = @transform_0, window_bounds = array<i64: 1, 136, 128>}, {pipeline_mode = #tpu.pipeline_mode<synchronous>, transform_indices = @transform_1, window_bounds = array<i64: 2, 128>}, {pipeline_mode = #tpu.pipeline_mode<synchronous>, transform_indices = @transform_2, window_bounds = array<i64: 5, 128, 384>}, {pipeline_mode = #tpu.pipeline_mode<synchronous>, transform_indices = @transform_3, window_bounds = array<i64: 2, 384>}, {transform_indices = @transform_4, window_bounds = array<i64: 1, 1>}, {transform_indices = @transform_5, window_bounds = array<i64: 1, 8, 128>}]} {
    %c0 = arith.constant 0 : index
    %c0_0 = arith.constant 0 : index
    %c0_1 = arith.constant 0 : index
    %0 = vector.load %arg1[%c0, %c0_0, %c0_1] : memref<1x136x128xf32, #tpu.memory_space<vmem>>, vector<1x136x128xf32>
    %1 = vector.shape_cast %0 : vector<1x136x128xf32> to vector<136x128xf32>
    %cst = arith.constant dense<0.000000e+00> : vector<136xf32>
    %2 = vector.multi_reduction <add>, %1, %cst [1] : vector<136x128xf32> to vector<136xf32>
    %3 = vector.shape_cast %2 : vector<136xf32> to vector<136x1xf32>
    %cst_2 = arith.constant 1.280000e+02 : f32
    %4 = vector.broadcast %cst_2 : f32 to vector<136x1xf32>
    %5 = arith.divf %3, %4 : vector<136x1xf32>
    %6 = vector.broadcast %5 : vector<136x1xf32> to vector<136x128xf32>
    %7 = arith.subf %1, %6 : vector<136x128xf32>
    %8 = arith.mulf %7, %7 : vector<136x128xf32>
    %cst_3 = arith.constant dense<0.000000e+00> : vector<136xf32>
    %9 = vector.multi_reduction <add>, %8, %cst_3 [1] : vector<136x128xf32> to vector<136xf32>
    %10 = vector.shape_cast %9 : vector<136xf32> to vector<136x1xf32>
    %cst_4 = arith.constant 1.280000e+02 : f32
    %11 = vector.broadcast %cst_4 : f32 to vector<136x1xf32>
    %12 = arith.divf %10, %11 : vector<136x1xf32>
    %cst_5 = arith.constant 9.99999996E-13 : f32
    %13 = vector.broadcast %cst_5 : f32 to vector<136x1xf32>
    %14 = arith.addf %12, %13 : vector<136x1xf32>
    %15 = math.rsqrt %14 : vector<136x1xf32>
    %16 = vector.broadcast %15 : vector<136x1xf32> to vector<136x128xf32>
    %17 = arith.mulf %7, %16 : vector<136x128xf32>
    %c0_6 = arith.constant 0 : index
    %c0_7 = arith.constant 0 : index
    %18 = vector.load %arg2[%c0_6, %c0_7] : memref<2x128xf32, #tpu.memory_space<vmem>>, vector<1x128xf32>
    %19 = vector.broadcast %18 : vector<1x128xf32> to vector<136x128xf32>
    %20 = arith.mulf %17, %19 : vector<136x128xf32>
    %c1 = arith.constant 1 : index
    %c0_8 = arith.constant 0 : index
    %21 = vector.load %arg2[%c1, %c0_8] : memref<2x128xf32, #tpu.memory_space<vmem>>, vector<1x128xf32>
    %22 = vector.broadcast %21 : vector<1x128xf32> to vector<136x128xf32>
    %23 = arith.addf %20, %22 : vector<136x128xf32>
    %cst_9 = arith.constant 0.000000e+00 : f32
    %24 = vector.broadcast %cst_9 : f32 to vector<128x384xf32>
    %25 = vector.extract_strided_slice %23 {offsets = [0, 0], sizes = [128, 128], strides = [1, 1]} : vector<136x128xf32> to vector<128x128xf32>
    %26 = arith.truncf %25 : vector<128x128xf32> to vector<128x128xbf16>
    %c0_10 = arith.constant 0 : index
    %c0_11 = arith.constant 0 : index
    %c0_12 = arith.constant 0 : index
    %27 = vector.load %arg3[%c0_10, %c0_11, %c0_12] : memref<5x128x384xbf16, #tpu.memory_space<vmem>>, vector<1x128x384xbf16>
    %28 = vector.shape_cast %27 : vector<1x128x384xbf16> to vector<128x384xbf16>
    %cst_13 = arith.constant dense<0.000000e+00> : vector<128x384xf32>
    %29 = tpu.matmul %26, %28, %cst_13 {dimension_numbers = #tpu.dot_dimension_numbers<[1], [0], [0], [1], [0, 0, 1, 1], [], []>} : vector<128x128xbf16>, vector<128x384xbf16>, vector<128x384xf32> -> vector<128x384xf32>
    %30 = arith.addf %24, %29 : vector<128x384xf32>
    %31 = vector.extract_strided_slice %23 {offsets = [1, 0], sizes = [128, 128], strides = [1, 1]} : vector<136x128xf32> to vector<128x128xf32>
    %32 = arith.truncf %31 : vector<128x128xf32> to vector<128x128xbf16>
    %c1_14 = arith.constant 1 : index
    %c0_15 = arith.constant 0 : index
    %c0_16 = arith.constant 0 : index
    %33 = vector.load %arg3[%c1_14, %c0_15, %c0_16] : memref<5x128x384xbf16, #tpu.memory_space<vmem>>, vector<1x128x384xbf16>
    %34 = vector.shape_cast %33 : vector<1x128x384xbf16> to vector<128x384xbf16>
    %cst_17 = arith.constant dense<0.000000e+00> : vector<128x384xf32>
    %35 = tpu.matmul %32, %34, %cst_17 {dimension_numbers = #tpu.dot_dimension_numbers<[1], [0], [0], [1], [0, 0, 1, 1], [], []>} : vector<128x128xbf16>, vector<128x384xbf16>, vector<128x384xf32> -> vector<128x384xf32>
    %36 = arith.addf %30, %35 : vector<128x384xf32>
    %37 = vector.extract_strided_slice %23 {offsets = [2, 0], sizes = [128, 128], strides = [1, 1]} : vector<136x128xf32> to vector<128x128xf32>
    %38 = arith.truncf %37 : vector<128x128xf32> to vector<128x128xbf16>
    %c2 = arith.constant 2 : index
    %c0_18 = arith.constant 0 : index
    %c0_19 = arith.constant 0 : index
    %39 = vector.load %arg3[%c2, %c0_18, %c0_19] : memref<5x128x384xbf16, #tpu.memory_space<vmem>>, vector<1x128x384xbf16>
    %40 = vector.shape_cast %39 : vector<1x128x384xbf16> to vector<128x384xbf16>
    %cst_20 = arith.constant dense<0.000000e+00> : vector<128x384xf32>
    %41 = tpu.matmul %38, %40, %cst_20 {dimension_numbers = #tpu.dot_dimension_numbers<[1], [0], [0], [1], [0, 0, 1, 1], [], []>} : vector<128x128xbf16>, vector<128x384xbf16>, vector<128x384xf32> -> vector<128x384xf32>
    %42 = arith.addf %36, %41 : vector<128x384xf32>
    %43 = vector.extract_strided_slice %23 {offsets = [3, 0], sizes = [128, 128], strides = [1, 1]} : vector<136x128xf32> to vector<128x128xf32>
    %44 = arith.truncf %43 : vector<128x128xf32> to vector<128x128xbf16>
    %c3 = arith.constant 3 : index
    %c0_21 = arith.constant 0 : index
    %c0_22 = arith.constant 0 : index
    %45 = vector.load %arg3[%c3, %c0_21, %c0_22] : memref<5x128x384xbf16, #tpu.memory_space<vmem>>, vector<1x128x384xbf16>
    %46 = vector.shape_cast %45 : vector<1x128x384xbf16> to vector<128x384xbf16>
    %cst_23 = arith.constant dense<0.000000e+00> : vector<128x384xf32>
    %47 = tpu.matmul %44, %46, %cst_23 {dimension_numbers = #tpu.dot_dimension_numbers<[1], [0], [0], [1], [0, 0, 1, 1], [], []>} : vector<128x128xbf16>, vector<128x384xbf16>, vector<128x384xf32> -> vector<128x384xf32>
    %48 = arith.addf %42, %47 : vector<128x384xf32>
    %49 = vector.extract_strided_slice %23 {offsets = [4, 0], sizes = [128, 128], strides = [1, 1]} : vector<136x128xf32> to vector<128x128xf32>
    %50 = arith.truncf %49 : vector<128x128xf32> to vector<128x128xbf16>
    %c4 = arith.constant 4 : index
    %c0_24 = arith.constant 0 : index
    %c0_25 = arith.constant 0 : index
    %51 = vector.load %arg3[%c4, %c0_24, %c0_25] : memref<5x128x384xbf16, #tpu.memory_space<vmem>>, vector<1x128x384xbf16>
    %52 = vector.shape_cast %51 : vector<1x128x384xbf16> to vector<128x384xbf16>
    %cst_26 = arith.constant dense<0.000000e+00> : vector<128x384xf32>
    %53 = tpu.matmul %50, %52, %cst_26 {dimension_numbers = #tpu.dot_dimension_numbers<[1], [0], [0], [1], [0, 0, 1, 1], [], []>} : vector<128x128xbf16>, vector<128x384xbf16>, vector<128x384xf32> -> vector<128x384xf32>
    %54 = arith.addf %48, %53 : vector<128x384xf32>
    %c0_27 = arith.constant 0 : index
    %c0_28 = arith.constant 0 : index
    %55 = vector.load %arg4[%c0_27, %c0_28] : memref<2x384xf32, #tpu.memory_space<vmem>>, vector<1x384xf32>
    %56 = vector.broadcast %55 : vector<1x384xf32> to vector<128x384xf32>
    %57 = arith.addf %54, %56 : vector<128x384xf32>
    %cst_29 = arith.constant 0.000000e+00 : f32
    %58 = vector.broadcast %cst_29 : f32 to vector<128x384xf32>
    %59 = arith.maximumf %57, %58 : vector<128x384xf32>
    %60 = tpu.iota {dimensions = array<i32: 0>} : vector<128x384xi32>
    %61 = tpu.iota {dimensions = array<i32: 1>} : vector<128x384xi32>
    %c0_i32 = arith.constant 0 : i32
    %62 = vector.broadcast %c0_i32 : i32 to vector<128x384xi32>
    %c0_i32_30 = arith.constant 0 : i32
    %63 = vector.broadcast %c0_i32_30 : i32 to vector<128x384xi32>
    %64 = arith.cmpi sge, %61, %63 : vector<128x384xi32>
    %c128_i32 = arith.constant 128 : i32
    %65 = vector.broadcast %c128_i32 : i32 to vector<128x384xi32>
    %66 = arith.cmpi slt, %61, %65 : vector<128x384xi32>
    %67 = arith.andi %64, %66 : vector<128x384xi1>
    %c126_i32 = arith.constant 126 : i32
    %68 = vector.broadcast %c126_i32 : i32 to vector<128x384xi32>
    %69 = arith.select %67, %68, %62 : vector<128x384xi1>, vector<128x384xi32>
    %c128_i32_31 = arith.constant 128 : i32
    %70 = vector.broadcast %c128_i32_31 : i32 to vector<128x384xi32>
    %71 = arith.cmpi sge, %61, %70 : vector<128x384xi32>
    %c256_i32 = arith.constant 256 : i32
    %72 = vector.broadcast %c256_i32 : i32 to vector<128x384xi32>
    %73 = arith.cmpi slt, %61, %72 : vector<128x384xi32>
    %74 = arith.andi %71, %73 : vector<128x384xi1>
    %c125_i32 = arith.constant 125 : i32
    %75 = vector.broadcast %c125_i32 : i32 to vector<128x384xi32>
    %76 = arith.select %74, %75, %69 : vector<128x384xi1>, vector<128x384xi32>
    %c256_i32_32 = arith.constant 256 : i32
    %77 = vector.broadcast %c256_i32_32 : i32 to vector<128x384xi32>
    %78 = arith.cmpi sge, %61, %77 : vector<128x384xi32>
    %c384_i32 = arith.constant 384 : i32
    %79 = vector.broadcast %c384_i32 : i32 to vector<128x384xi32>
    %80 = arith.cmpi slt, %61, %79 : vector<128x384xi32>
    %81 = arith.andi %78, %80 : vector<128x384xi1>
    %c124_i32 = arith.constant 124 : i32
    %82 = vector.broadcast %c124_i32 : i32 to vector<128x384xi32>
    %83 = arith.select %81, %82, %76 : vector<128x384xi1>, vector<128x384xi32>
    %84 = arith.cmpi slt, %60, %83 : vector<128x384xi32>
    %cst_33 = arith.constant 0xFF800000 : f32
    %85 = vector.broadcast %cst_33 : f32 to vector<128x384xf32>
    %86 = arith.select %84, %59, %85 : vector<128x384xi1>, vector<128x384xf32>
    %cst_34 = arith.constant dense<0xFF800000> : vector<384xf32>
    %87 = vector.multi_reduction <maximumf>, %86, %cst_34 [0] : vector<128x384xf32> to vector<384xf32>
    %88 = vector.shape_cast %87 : vector<384xf32> to vector<1x384xf32>
    %c1_35 = arith.constant 1 : index
    %c0_36 = arith.constant 0 : index
    %89 = vector.load %arg4[%c1_35, %c0_36] : memref<2x384xf32, #tpu.memory_space<vmem>>, vector<1x384xf32>
    %90 = arith.mulf %88, %89 : vector<1x384xf32>
    %cst_37 = arith.constant dense<0.000000e+00> : vector<1xf32>
    %91 = vector.multi_reduction <add>, %90, %cst_37 [1] : vector<1x384xf32> to vector<1xf32>
    %92 = vector.shape_cast %91 : vector<1xf32> to vector<1x1xf32>
    %c0_38 = arith.constant 0 : index
    %c0_39 = arith.constant 0 : index
    %93 = memref.load %arg5[%c0_38, %c0_39] : memref<1x1xf32, #tpu.memory_space<smem>>
    %94 = vector.broadcast %93 : f32 to vector<1x1xf32>
    %95 = arith.addf %92, %94 : vector<1x1xf32>
    %96 = vector.shape_cast %95 : vector<1x1xf32> to vector<1x1x1xf32>
    %97 = vector.shape_cast %96 : vector<1x1x1xf32> to vector<1x1x1xf32>
    %98 = vector.broadcast %97 : vector<1x1x1xf32> to vector<1x8x128xf32>
    %c0_40 = arith.constant 0 : index
    %c0_41 = arith.constant 0 : index
    %c0_42 = arith.constant 0 : index
    %99 = vector.load %arg6[%c0_40, %c0_41, %c0_42] : memref<1x8x128xf32, #tpu.memory_space<vmem>>, vector<1x8x128xf32>
    tpu.vector_store %arg6[%c0_40, %c0_41, %c0_42], %98 {strides = array<i32>} : memref<1x8x128xf32, #tpu.memory_space<vmem>>, vector<1x8x128xf32>,
    return
  }
  func.func @transform_0(%arg0: i32) -> (i32, i32, i32) {
    %c0_i32 = arith.constant 0 : i32
    %c0_i32_0 = arith.constant 0 : i32
    %c0_i32_1 = arith.constant 0 : i32
    return %arg0, %c0_i32, %c0_i32_0 : i32, i32, i32
  }
  func.func @transform_1(%arg0: i32) -> (i32, i32) {
    %c0_i32 = arith.constant 0 : i32
    %c0_i32_0 = arith.constant 0 : i32
    %c0_i32_1 = arith.constant 0 : i32
    return %c0_i32, %c0_i32_0 : i32, i32
  }
  func.func @transform_2(%arg0: i32) -> (i32, i32, i32) {
    %c0_i32 = arith.constant 0 : i32
    %c0_i32_0 = arith.constant 0 : i32
    %c0_i32_1 = arith.constant 0 : i32
    %c0_i32_2 = arith.constant 0 : i32
    return %c0_i32, %c0_i32_0, %c0_i32_1 : i32, i32, i32
  }
  func.func @transform_3(%arg0: i32) -> (i32, i32) {
    %c0_i32 = arith.constant 0 : i32
    %c0_i32_0 = arith.constant 0 : i32
    %c0_i32_1 = arith.constant 0 : i32
    return %c0_i32, %c0_i32_0 : i32, i32
  }
  func.func @transform_4(%arg0: i32) -> (i32, i32) {
    %c0_i32 = arith.constant 0 : i32
    %c0_i32_0 = arith.constant 0 : i32
    %c0_i32_1 = arith.constant 0 : i32
    return %c0_i32, %c0_i32_0 : i32, i32
  }
  func.func @transform_5(%arg0: i32) -> (i32, i32, i32) {
    %c0_i32 = arith.constant 0 : i32
    %c0_i32_0 = arith.constant 0 : i32
    %c0_i32_1 = arith.constant 0 : i32
    return %arg0, %c0_i32, %c0_i32_0 : i32, i32, i32
  }
}

</mosaic_0001>

<llo_original>
// kernel: bert_textcnn_forward.1
$region0: #{bert_textcnn_forward.1}
  #allocation0 [shape = 'u32[]', space=smem, size = 0x4, offset = 0x4, fixed_abs, tag = 'smem constant byte address 0x4 - core index']
  #allocation1 [shape = 'u32[144,128]{1,0:T(1,128)}', space=vmem, size = 0x12000, scoped, tag = 'internal scratch']
  #allocation2 [shape = 'f32[1,1]{1,0:T(1,128)S(6)}', space=smem, size = 0x200, scoped, tag = 'scoped memory for bert_textcnn_forward.1']
  %s0 = inlined_call_operand.vmem [shape: f32[2,136,128], index: 0, kind: input, shape index: {}]
  %s1 = inlined_call_operand.vmem [shape: f32[2,128], index: 1, kind: input, shape index: {}]
  %s2 = inlined_call_operand.vmem [shape: bf16[5,128,384], index: 2, kind: input, shape index: {}]
  %s3 = inlined_call_operand.vmem [shape: f32[2,384], index: 3, kind: input, shape index: {}]
  %s4 = inlined_call_operand.<no memory space> [shape: f32[1,1], index: 4, kind: input, shape index: {}]
  %s5 = inlined_call_operand.vmem [shape: f32[2,8,128], index: 5, kind: output, shape index: {}]
  %s6 = sld [smem:[#allocation0]]
  $region53: #{bert_textcnn_forward.1} parent=0
    _
  %s8 = ssub.s32 1, %s6
  %s9 = scalar_select 0, %s8, %s6
  %10 = sst [smem:[#allocation2]] %s4
  loop: start=0, step=1, limit=4
  $region2: #{bert_textcnn_forward.1} parent=0 // loop_pre_header
    _
  $region3: #{bert_textcnn_forward.1} parent=0 // loop_header
    %s12 = sphi 0, %s16
    %p13 = scmp.ge.s32.totalorder %s12, 4
    %s22 = sphi 0, %s24
    %s25 = sphi 0, %s22
    %s26 = sphi 0, %s25
    %s42 = sphi 0, %s26
    %s46 = sphi 0, %s46
    %s48 = sphi 0, %s46
    %s49 = sphi 0, %s48
    %s63 = sphi 0, %s49
    %s67 = sphi 0, %s67
    %s69 = sphi 0, %s67
    %s70 = sphi 0, %s69
    %s84 = sphi 0, %s70
    %s88 = sphi 0, %s88
    %s90 = sphi 0, %s88
    %s91 = sphi 0, %s90
    %s105 = sphi 0, %s91
    %s109 = sphi 0, %s109
    %s111 = sphi 0, %s109
    %s112 = sphi 0, %s111
    %s126 = sphi 0, %s112
    %s132 = sphi 0, %s134
    %s135 = sphi 0, %s132
    %s136 = sphi 0, %s135
    %s152 = sphi 0, %s136
  $region4: #{bert_textcnn_forward.1} parent=0 // loop_header_branch
    %15 = sbr.rel (%p13) target = $region8
  $region5: #{bert_textcnn_forward.1} parent=0 // loop_body
    %s17 = ssub.s32 %s12, 1
    %s18 = ssub.s32 %s12, 2
    %s19 = sadd.s32 %s12, 1
    %s20 = ssub.s32 %s12, %s19
    %p21 = scmp.eq.s32.totalorder %s20, 0
    %s23 = sadd.s32 %s22, 1
    %s24 = scalar_select %p21, %s22, %s23
    %p27 = pneg %p21
    %p28 = scmp.eq.s32.totalorder %s12, 1
    %p29 = por %p27, %p28
    %p30 = scmp.ne.s32.totalorder %s22, %s25
    %p31 = scmp.eq.s32.totalorder %s12, 0
    %p32 = por %p30, %p31
    %p33 = scmp.ne.s32.totalorder %s22, %s25
    %p34 = scmp.eq.s32.totalorder %s17, 1
    %p35 = por %p33, %p34
    %p36 = scmp.ne.s32.totalorder %s25, %s26
    %p37 = scmp.eq.s32.totalorder %s17, 0
    %p38 = por %p36, %p37
    %p39 = scmp.ne.s32.totalorder %s25, %s26
    %p40 = scmp.eq.s32.totalorder %s18, 1
    %p41 = por %p39, %p40
    %p43 = scmp.ne.s32.totalorder %s26, %s42
    %p44 = scmp.eq.s32.totalorder %s18, 0
    %p45 = por %p43, %p44
    %s47 = sadd.s32 %s46, 1
    %p50 = scmp.eq.s32.totalorder %s12, 1
    %p51 = scmp.ne.s32.totalorder %s46, %s48
    %p52 = scmp.eq.s32.totalorder %s12, 0
    %p53 = por %p51, %p52
    %p54 = scmp.ne.s32.totalorder %s46, %s48
    %p55 = scmp.eq.s32.totalorder %s17, 1
    %p56 = por %p54, %p55
    %p57 = scmp.ne.s32.totalorder %s48, %s49
    %p58 = scmp.eq.s32.totalorder %s17, 0
    %p59 = por %p57, %p58
    %p60 = scmp.ne.s32.totalorder %s48, %s49
    %p61 = scmp.eq.s32.totalorder %s18, 1
    %p62 = por %p60, %p61
    %p64 = scmp.ne.s32.totalorder %s49, %s63
    %p65 = scmp.eq.s32.totalorder %s18, 0
    %p66 = por %p64, %p65
    %s68 = sadd.s32 %s67, 1
    %p71 = scmp.eq.s32.totalorder %s12, 1
    %p72 = scmp.ne.s32.totalorder %s67, %s69
    %p73 = scmp.eq.s32.totalorder %s12, 0
    %p74 = por %p72, %p73
    %p75 = scmp.ne.s32.totalorder %s67, %s69
    %p76 = scmp.eq.s32.totalorder %s17, 1
    %p77 = por %p75, %p76
    %p78 = scmp.ne.s32.totalorder %s69, %s70
    %p79 = scmp.eq.s32.totalorder %s17, 0
    %p80 = por %p78, %p79
    %p81 = scmp.ne.s32.totalorder %s69, %s70
    %p82 = scmp.eq.s32.totalorder %s18, 1
    %p83 = por %p81, %p82
    %p85 = scmp.ne.s32.totalorder %s70, %s84
    %p86 = scmp.eq.s32.totalorder %s18, 0
    %p87 = por %p85, %p86
    %s89 = sadd.s32 %s88, 1
    %p92 = scmp.eq.s32.totalorder %s12, 1
    %p93 = scmp.ne.s32.totalorder %s88, %s90
    %p94 = scmp.eq.s32.totalorder %s12, 0
    %p95 = por %p93, %p94
    %p96 = scmp.ne.s32.totalorder %s88, %s90
    %p97 = scmp.eq.s32.totalorder %s17, 1
    %p98 = por %p96, %p97
    %p99 = scmp.ne.s32.totalorder %s90, %s91
    %p100 = scmp.eq.s32.totalorder %s17, 0
    %p101 = por %p99, %p100
    %p102 = scmp.ne.s32.totalorder %s90, %s91
    %p103 = scmp.eq.s32.totalorder %s18, 1
    %p104 = por %p102, %p103
    %p106 = scmp.ne.s32.totalorder %s91, %s105
    %p107 = scmp.eq.s32.totalorder %s18, 0
    %p108 = por %p106, %p107
    %s110 = sadd.s32 %s109, 1
    %p113 = scmp.eq.s32.totalorder %s12, 1
    %p114 = scmp.ne.s32.totalorder %s109, %s111
    %p115 = scmp.eq.s32.totalorder %s12, 0
    %p116 = por %p114, %p115
    %p117 = scmp.ne.s32.totalorder %s109, %s111
    %p118 = scmp.eq.s32.totalorder %s17, 1
    %p119 = por %p117, %p118
    %p120 = scmp.ne.s32.totalorder %s111, %s112
    %p121 = scmp.eq.s32.totalorder %s17, 0
    %p122 = por %p120, %p121
    %p123 = scmp.ne.s32.totalorder %s111, %s112
    %p124 = scmp.eq.s32.totalorder %s18, 1
    %p125 = por %p123, %p124
    %p127 = scmp.ne.s32.totalorder %s112, %s126
    %p128 = scmp.eq.s32.totalorder %s18, 0
    %p129 = por %p127, %p128
    %s130 = ssub.s32 %s12, %s19
    %p131 = scmp.eq.s32.totalorder %s130, 0
    %s133 = sadd.s32 %s132, 1
    %s134 = scalar_select %p131, %s132, %s133
    %p137 = pneg %p131
    %p138 = scmp.eq.s32.totalorder %s12, 1
    %p139 = por %p137, %p138
    %p140 = scmp.ne.s32.totalorder %s132, %s135
    %p141 = scmp.eq.s32.totalorder %s12, 0
    %p142 = por %p140, %p141
    %p143 = scmp.ne.s32.totalorder %s132, %s135
    %p144 = scmp.eq.s32.totalorder %s17, 1
    %p145 = por %p143, %p144
    %p146 = scmp.ne.s32.totalorder %s135, %s136
    %p147 = scmp.eq.s32.totalorder %s17, 0
    %p148 = por %p146, %p147
    %p149 = scmp.ne.s32.totalorder %s135, %s136
    %p150 = scmp.eq.s32.totalorder %s18, 1
    %p151 = por %p149, %p150
    %p153 = scmp.ne.s32.totalorder %s136, %s152
    %p154 = scmp.eq.s32.totalorder %s18, 0
    %p155 = por %p153, %p154
    %p156 = scmp.le.s32.totalorder 1, %s12
    %p157 = scmp.lt.s32.totalorder %s12, 3
    %p158 = pnand %p156, %p157
    %p159 = pneg %p158
    // Predicated region
    $region9: #{bert_textcnn_forward.1} parent=5 // pred_check
      _
    $region10: #{bert_textcnn_forward.1} parent=5 // pred_check_branch
      %161 = sbr.rel (%p158) target = $region12
    $region11: #{bert_textcnn_forward.1} parent=5 // pred_region
      %s162 = ssub.s32 %s12, 1
      // Predicated region
      $region13: #{bert_textcnn_forward.1} parent=11 // pred_check
        %p163 = pneg %p59
      $region14: #{bert_textcnn_forward.1} parent=11 // pred_check_branch
        %165 = sbr.rel (%p163) target = $region16
      $region15: #{bert_textcnn_forward.1} parent=11 // pred_region
        _
      $region16: #{bert_textcnn_forward.1} parent=11 // pred_fallthru
        _
      // Predicated region
      $region17: #{bert_textcnn_forward.1} parent=11 // pred_check
        %p166 = pneg %p80
      $region18: #{bert_textcnn_forward.1} parent=11 // pred_check_branch
        %168 = sbr.rel (%p166) target = $region20
      $region19: #{bert_textcnn_forward.1} parent=11 // pred_region
        _
      $region20: #{bert_textcnn_forward.1} parent=11 // pred_fallthru
        _
      // Predicated region
      $region21: #{bert_textcnn_forward.1} parent=11 // pred_check
        %p169 = pneg %p101
      $region22: #{bert_textcnn_forward.1} parent=11 // pred_check_branch
        %171 = sbr.rel (%p169) target = $region24
      $region23: #{bert_textcnn_forward.1} parent=11 // pred_region
        _
      $region24: #{bert_textcnn_forward.1} parent=11 // pred_fallthru
        _
      // Predicated region
      $region25: #{bert_textcnn_forward.1} parent=11 // pred_check
        %p172 = pneg %p122
      $region26: #{bert_textcnn_forward.1} parent=11 // pred_check_branch
        %174 = sbr.rel (%p172) target = $region28
      $region27: #{bert_textcnn_forward.1} parent=11 // pred_region
        _
      $region28: #{bert_textcnn_forward.1} parent=11 // pred_fallthru
        _
    $region12: #{bert_textcnn_forward.1} parent=5 // pred_fallthru
      _
    %p175 = scmp.lt.s32.totalorder %s12, 2
    // Predicated region
    $region29: #{bert_textcnn_forward.1} parent=5 // pred_check
      %p176 = pneg %p175
    $region30: #{bert_textcnn_forward.1} parent=5 // pred_check_branch
      %178 = sbr.rel (%p176) target = $region32
    $region31: #{bert_textcnn_forward.1} parent=5 // pred_region
      // Predicated region
      $region33: #{bert_textcnn_forward.1} parent=31 // pred_check
        %p179 = pneg %p32
      $region34: #{bert_textcnn_forward.1} parent=31 // pred_check_branch
        %181 = sbr.rel (%p179) target = $region36
      $region35: #{bert_textcnn_forward.1} parent=31 // pred_region
        %p182 = scmp.lt.s32.totalorder %s12, 1
        %s183 = scalar_select %p182, %s12, 1
        %s184 = smul.addr %s183, 17
        %s185 = smul.addr %s184, 8
        %s186 = scalar_lea.vmem %s0, %s185
      $region36: #{bert_textcnn_forward.1} parent=31 // pred_fallthru
        _
    $region32: #{bert_textcnn_forward.1} parent=5 // pred_fallthru
      _
    %p187 = scmp.le.s32.totalorder 1, %s12
    %p188 = scmp.lt.s32.totalorder %s12, 3
    %p189 = pnand %p187, %p188
    %p190 = pneg %p189
    // Predicated region
    $region37: #{bert_textcnn_forward.1} parent=5 // pred_check
      _
    $region38: #{bert_textcnn_forward.1} parent=5 // pred_check_branch
      %192 = sbr.rel (%p189) target = $region40
    $region39: #{bert_textcnn_forward.1} parent=5 // pred_region
      %s193 = ssub.s32 %s12, 1
      %p194 = scmp.lt.s32.totalorder %s17, 1
      %s195 = scalar_select %p194, %s17, 1
      %s196 = smul.addr %s195, 17
      %s197 = smul.addr %s196, 8
      %s198 = scalar_lea.vmem %s0, %s197
      %p199 = pneg %p38
      %p200 = pneg %p35
      %p201 = pneg %p59
      %p202 = pneg %p56
      %p203 = pneg %p80
      %p204 = pneg %p77
      %p205 = pneg %p101
      %p206 = pneg %p98
      %p207 = pneg %p122
      %p208 = pneg %p119
      %p209 = pneg %p148
      %p210 = pneg %p145
      %p211 = scmp.lt.s32.totalorder %s17, 1
      %s212 = scalar_select %p211, %s17, 1
      %s213 = smul.addr %s212, 8
      %s214 = scalar_lea.vmem %s5, %s213
      %p215 = scmp.lt.s32.totalorder %s17, 1
      %s216 = scalar_select %p215, %s17, 1
      %s217 = smul.addr %s216, 17
      %s218 = smul.addr %s217, 8
      %s219 = scalar_lea.vmem %s0, %s218
      %p220 = scmp.lt.s32.totalorder %s17, 1
      %s221 = scalar_select %p220, %s17, 1
      %s222 = smul.addr %s221, 8
      %s223 = scalar_lea.vmem %s5, %s222
      %v225 = vld [vmem:[%s219] sm:$0xff]
      %v226 = vld [vmem:[%s219 + $0x8] sm:$0xff]
      %v227 = vld [vmem:[%s219 + $0x10] sm:$0xff]
      %v228 = vld [vmem:[%s219 + $0x18] sm:$0xff]
      %v229 = vld [vmem:[%s219 + $0x20] sm:$0xff]
      %v230 = vld [vmem:[%s219 + $0x28] sm:$0xff]
      %v231 = vld [vmem:[%s219 + $0x30] sm:$0xff]
      %v232 = vld [vmem:[%s219 + $0x38] sm:$0xff]
      %v233 = vld [vmem:[%s219 + $0x40] sm:$0xff]
      %v234 = vld [vmem:[%s219 + $0x48] sm:$0xff]
      %v235 = vld [vmem:[%s219 + $0x50] sm:$0xff]
      %v236 = vld [vmem:[%s219 + $0x58] sm:$0xff]
      %v237 = vld [vmem:[%s219 + $0x60] sm:$0xff]
      %v238 = vld [vmem:[%s219 + $0x68] sm:$0xff]
      %v239 = vld [vmem:[%s219 + $0x70] sm:$0xff]
      %v240 = vld [vmem:[%s219 + $0x78] sm:$0xff]
      %v241 = vld [vmem:[%s219 + $0x80] sm:$0xff]
      %242 = vadd.xlane.f32.xlu0 %v225
      %v243 = vpop.xlane.xlu0 %242
      %244 = vadd.xlane.f32.xlu0 %v226
      %v245 = vpop.xlane.xlu0 %244
      %246 = vadd.xlane.f32.xlu0 %v227
      %v247 = vpop.xlane.xlu0 %246
      %248 = vadd.xlane.f32.xlu0 %v228
      %v249 = vpop.xlane.xlu0 %248
      %250 = vadd.xlane.f32.xlu0 %v229
      %v251 = vpop.xlane.xlu0 %250
      %252 = vadd.xlane.f32.xlu0 %v230
      %v253 = vpop.xlane.xlu0 %252
      %254 = vadd.xlane.f32.xlu0 %v231
      %v255 = vpop.xlane.xlu0 %254
      %256 = vadd.xlane.f32.xlu0 %v232
      %v257 = vpop.xlane.xlu0 %256
      %258 = vadd.xlane.f32.xlu0 %v233
      %v259 = vpop.xlane.xlu0 %258
      %260 = vadd.xlane.f32.xlu0 %v234
      %v261 = vpop.xlane.xlu0 %260
      %262 = vadd.xlane.f32.xlu0 %v235
      %v263 = vpop.xlane.xlu0 %262
      %264 = vadd.xlane.f32.xlu0 %v236
      %v265 = vpop.xlane.xlu0 %264
      %266 = vadd.xlane.f32.xlu0 %v237
      %v267 = vpop.xlane.xlu0 %266
      %268 = vadd.xlane.f32.xlu0 %v238
      %v269 = vpop.xlane.xlu0 %268
      %270 = vadd.xlane.f32.xlu0 %v239
      %v271 = vpop.xlane.xlu0 %270
      %272 = vadd.xlane.f32.xlu0 %v240
      %v273 = vpop.xlane.xlu0 %272
      %274 = vadd.xlane.f32.xlu0 %v241
      %v275 = vpop.xlane.xlu0 %274
      %v276 = vrcp.pop 128.0
      %v277 = vmul.f32 %v243, %v276
      %v278 = vmul.f32 %v245, %v276
      %v279 = vmul.f32 %v247, %v276
      %v280 = vmul.f32 %v249, %v276
      %v281 = vmul.f32 %v251, %v276
      %v282 = vmul.f32 %v253, %v276
      %v283 = vmul.f32 %v255, %v276
      %v284 = vmul.f32 %v257, %v276
      %v285 = vmul.f32 %v259, %v276
      %v286 = vmul.f32 %v261, %v276
      %v287 = vmul.f32 %v263, %v276
      %v288 = vmul.f32 %v265, %v276
      %v289 = vmul.f32 %v267, %v276
      %v290 = vmul.f32 %v269, %v276
      %v291 = vmul.f32 %v271, %v276
      %v292 = vmul.f32 %v273, %v276
      %v293 = vmul.f32 %v275, %v276
      %v294 = vsub.f32 %v225, %v277
      %v295 = vsub.f32 %v226, %v278
      %v296 = vsub.f32 %v227, %v279
      %v297 = vsub.f32 %v228, %v280
      %v298 = vsub.f32 %v229, %v281
      %v299 = vsub.f32 %v230, %v282
      %v300 = vsub.f32 %v231, %v283
      %v301 = vsub.f32 %v232, %v284
      %v302 = vsub.f32 %v233, %v285
      %v303 = vsub.f32 %v234, %v286
      %v304 = vsub.f32 %v235, %v287
      %v305 = vsub.f32 %v236, %v288
      %v306 = vsub.f32 %v237, %v289
      %v307 = vsub.f32 %v238, %v290
      %v308 = vsub.f32 %v239, %v291
      %v309 = vsub.f32 %v240, %v292
      %v310 = vsub.f32 %v241, %v293
      %v311 = vmul.f32 %v294, %v294
      %v312 = vmul.f32 %v295, %v295
      %v313 = vmul.f32 %v296, %v296
      %v314 = vmul.f32 %v297, %v297
      %v315 = vmul.f32 %v298, %v298
      %v316 = vmul.f32 %v299, %v299
      %v317 = vmul.f32 %v300, %v300
      %v318 = vmul.f32 %v301, %v301
      %v319 = vmul.f32 %v302, %v302
      %v320 = vmul.f32 %v303, %v303
      %v321 = vmul.f32 %v304, %v304
      %v322 = vmul.f32 %v305, %v305
      %v323 = vmul.f32 %v306, %v306
      %v324 = vmul.f32 %v307, %v307
      %v325 = vmul.f32 %v308, %v308
      %v326 = vmul.f32 %v309, %v309
      %v327 = vmul.f32 %v310, %v310
      %328 = vadd.xlane.f32.xlu0 %v311
      %v329 = vpop.xlane.xlu0 %328
      %330 = vadd.xlane.f32.xlu0 %v312
      %v331 = vpop.xlane.xlu0 %330
      %332 = vadd.xlane.f32.xlu0 %v313
      %v333 = vpop.xlane.xlu0 %332
      %334 = vadd.xlane.f32.xlu0 %v314
      %v335 = vpop.xlane.xlu0 %334
      %336 = vadd.xlane.f32.xlu0 %v315
      %v337 = vpop.xlane.xlu0 %336
      %338 = vadd.xlane.f32.xlu0 %v316
      %v339 = vpop.xlane.xlu0 %338
      %340 = vadd.xlane.f32.xlu0 %v317
      %v341 = vpop.xlane.xlu0 %340
      %342 = vadd.xlane.f32.xlu0 %v318
      %v343 = vpop.xlane.xlu0 %342
      %344 = vadd.xlane.f32.xlu0 %v319
      %v345 = vpop.xlane.xlu0 %344
      %346 = vadd.xlane.f32.xlu0 %v320
      %v347 = vpop.xlane.xlu0 %346
      %348 = vadd.xlane.f32.xlu0 %v321
      %v349 = vpop.xlane.xlu0 %348
      %350 = vadd.xlane.f32.xlu0 %v322
      %v351 = vpop.xlane.xlu0 %350
      %352 = vadd.xlane.f32.xlu0 %v323
      %v353 = vpop.xlane.xlu0 %352
      %354 = vadd.xlane.f32.xlu0 %v324
      %v355 = vpop.xlane.xlu0 %354
      %356 = vadd.xlane.f32.xlu0 %v325
      %v357 = vpop.xlane.xlu0 %356
      %358 = vadd.xlane.f32.xlu0 %v326
      %v359 = vpop.xlane.xlu0 %358
      %360 = vadd.xlane.f32.xlu0 %v327
      %v361 = vpop.xlane.xlu0 %360
      %v362 = vmul.f32 %v329, %v276
      %v363 = vmul.f32 %v331, %v276
      %v364 = vmul.f32 %v333, %v276
      %v365 = vmul.f32 %v335, %v276
      %v366 = vmul.f32 %v337, %v276
      %v367 = vmul.f32 %v339, %v276
      %v368 = vmul.f32 %v341, %v276
      %v369 = vmul.f32 %v343, %v276
      %v370 = vmul.f32 %v345, %v276
      %v371 = vmul.f32 %v347, %v276
      %v372 = vmul.f32 %v349, %v276
      %v373 = vmul.f32 %v351, %v276
      %v374 = vmul.f32 %v353, %v276
      %v375 = vmul.f32 %v355, %v276
      %v376 = vmul.f32 %v357, %v276
      %v377 = vmul.f32 %v359, %v276
      %v378 = vmul.f32 %v361, %v276
      %v379 = vadd.f32 %v362, 1e-12
      %v380 = vadd.f32 %v363, 1e-12
      %v381 = vadd.f32 %v364, 1e-12
      %v382 = vadd.f32 %v365, 1e-12
      %v383 = vadd.f32 %v366, 1e-12
      %v384 = vadd.f32 %v367, 1e-12
      %v385 = vadd.f32 %v368, 1e-12
      %v386 = vadd.f32 %v369, 1e-12
      %v387 = vadd.f32 %v370, 1e-12
      %v388 = vadd.f32 %v371, 1e-12
      %v389 = vadd.f32 %v372, 1e-12
      %v390 = vadd.f32 %v373, 1e-12
      %v391 = vadd.f32 %v374, 1e-12
      %v392 = vadd.f32 %v375, 1e-12
      %v393 = vadd.f32 %v376, 1e-12
      %v394 = vadd.f32 %v377, 1e-12
      %v395 = vadd.f32 %v378, 1e-12
      %v396 = vrsqrt.pop %v379
      %v397 = vrsqrt.pop %v380
      %v398 = vrsqrt.pop %v381
      %v399 = vrsqrt.pop %v382
      %v400 = vrsqrt.pop %v383
      %v401 = vrsqrt.pop %v384
      %v402 = vrsqrt.pop %v385
      %v403 = vrsqrt.pop %v386
      %v404 = vrsqrt.pop %v387
      %v405 = vrsqrt.pop %v388
      %v406 = vrsqrt.pop %v389
      %v407 = vrsqrt.pop %v390
      %v408 = vrsqrt.pop %v391
      %v409 = vrsqrt.pop %v392
      %v410 = vrsqrt.pop %v393
      %v411 = vrsqrt.pop %v394
      %v412 = vrsqrt.pop %v395
      %v413 = vmul.f32 %v294, %v396
      %v414 = vmul.f32 %v295, %v397
      %v415 = vmul.f32 %v296, %v398
      %v416 = vmul.f32 %v297, %v399
      %v417 = vmul.f32 %v298, %v400
      %v418 = vmul.f32 %v299, %v401
      %v419 = vmul.f32 %v300, %v402
      %v420 = vmul.f32 %v301, %v403
      %v421 = vmul.f32 %v302, %v404
      %v422 = vmul.f32 %v303, %v405
      %v423 = vmul.f32 %v304, %v406
      %v424 = vmul.f32 %v305, %v407
      %v425 = vmul.f32 %v306, %v408
      %v426 = vmul.f32 %v307, %v409
      %v427 = vmul.f32 %v308, %v410
      %v428 = vmul.f32 %v309, %v411
      %v429 = vmul.f32 %v310, %v412
      %v430 = vld [vmem:[%s1] sm:$0x1]
      %v431 = vlaneseq
      %v432 = vshrl.u32 %v431, 7
      %v433 = vsub.s32 0, %v432
      %v434 = vrot.slane %v430, %v433
      %v435 = vmul.f32 %v413, %v434
      %v436 = vmul.f32 %v414, %v434
      %v437 = vmul.f32 %v415, %v434
      %v438 = vmul.f32 %v416, %v434
      %v439 = vmul.f32 %v417, %v434
      %v440 = vmul.f32 %v418, %v434
      %v441 = vmul.f32 %v419, %v434
      %v442 = vmul.f32 %v420, %v434
      %v443 = vmul.f32 %v421, %v434
      %v444 = vmul.f32 %v422, %v434
      %v445 = vmul.f32 %v423, %v434
      %v446 = vmul.f32 %v424, %v434
      %v447 = vmul.f32 %v425, %v434
      %v448 = vmul.f32 %v426, %v434
      %v449 = vmul.f32 %v427, %v434
      %v450 = vmul.f32 %v428, %v434
      %v451 = vmul.f32 %v429, %v434
      %v452 = vld [vmem:[%s1 + $0x1] sm:$0x1]
      %v453 = vlaneseq
      %v454 = vshrl.u32 %v453, 7
      %v455 = vsub.s32 0, %v454
      %v456 = vrot.slane %v452, %v455
      %v457 = vadd.f32 %v435, %v456
      %v458 = vadd.f32 %v436, %v456
      %v459 = vadd.f32 %v437, %v456
      %v460 = vadd.f32 %v438, %v456
      %v461 = vadd.f32 %v439, %v456
      %v462 = vadd.f32 %v440, %v456
      %v463 = vadd.f32 %v441, %v456
      %v464 = vadd.f32 %v442, %v456
      %v465 = vadd.f32 %v443, %v456
      %v466 = vadd.f32 %v444, %v456
      %v467 = vadd.f32 %v445, %v456
      %v468 = vadd.f32 %v446, %v456
      %v469 = vadd.f32 %v447, %v456
      %v470 = vadd.f32 %v448, %v456
      %v471 = vadd.f32 %v449, %v456
      %v472 = vadd.f32 %v450, %v456
      %v473 = vadd.f32 %v451, %v456
      %v474 = vpack.c.bf16 %v458, %v457
      %v475 = vpack.c.bf16 %v460, %v459
      %v476 = vpack.c.bf16 %v462, %v461
      %v477 = vpack.c.bf16 %v464, %v463
      %v478 = vpack.c.bf16 %v466, %v465
      %v479 = vpack.c.bf16 %v468, %v467
      %v480 = vpack.c.bf16 %v470, %v469
      %v481 = vpack.c.bf16 %v472, %v471
      %v482 = vld [vmem:[%s2] sm:$0xff]
      %v483 = vld [vmem:[%s2 + $0x8] sm:$0xf]
      %v484 = vld [vmem:[%s2 + $0xc] sm:$0xff]
      %v485 = vld [vmem:[%s2 + $0x14] sm:$0xf]
      %v486 = vld [vmem:[%s2 + $0x18] sm:$0xff]
      %v487 = vld [vmem:[%s2 + $0x20] sm:$0xf]
      %v488 = vld [vmem:[%s2 + $0x24] sm:$0xff]
      %v489 = vld [vmem:[%s2 + $0x2c] sm:$0xf]
      %v490 = vld [vmem:[%s2 + $0x30] sm:$0xff]
      %v491 = vld [vmem:[%s2 + $0x38] sm:$0xf]
      %v492 = vld [vmem:[%s2 + $0x3c] sm:$0xff]
      %v493 = vld [vmem:[%s2 + $0x44] sm:$0xf]
      %v494 = vld [vmem:[%s2 + $0x48] sm:$0xff]
      %v495 = vld [vmem:[%s2 + $0x50] sm:$0xf]
      %v496 = vld [vmem:[%s2 + $0x54] sm:$0xff]
      %v497 = vld [vmem:[%s2 + $0x5c] sm:$0xf]
      %v498 = vld [vmem:[%s2 + $0x60] sm:$0xff]
      %v499 = vld [vmem:[%s2 + $0x68] sm:$0xf]
      %v500 = vld [vmem:[%s2 + $0x6c] sm:$0xff]
      %v501 = vld [vmem:[%s2 + $0x74] sm:$0xf]
      %v502 = vld [vmem:[%s2 + $0x78] sm:$0xff]
      %v503 = vld [vmem:[%s2 + $0x80] sm:$0xf]
      %v504 = vld [vmem:[%s2 + $0x84] sm:$0xff]
      %v505 = vld [vmem:[%s2 + $0x8c] sm:$0xf]
      %v506 = vld [vmem:[%s2 + $0x90] sm:$0xff]
      %v507 = vld [vmem:[%s2 + $0x98] sm:$0xf]
      %v508 = vld [vmem:[%s2 + $0x9c] sm:$0xff]
      %v509 = vld [vmem:[%s2 + $0xa4] sm:$0xf]
      %v510 = vld [vmem:[%s2 + $0xa8] sm:$0xff]
      %v511 = vld [vmem:[%s2 + $0xb0] sm:$0xf]
      %v512 = vld [vmem:[%s2 + $0xb4] sm:$0xff]
      %v513 = vld [vmem:[%s2 + $0xbc] sm:$0xf]
      %v514 = vpack.c.bf16 %v473, %v473
      %s515 = scalar_lea.vmem %s2, 192
      %v516 = vld [vmem:[%s515] sm:$0xff]
      %v517 = vld [vmem:[%s515 + $0x8] sm:$0xf]
      %v518 = vld [vmem:[%s515 + $0xc] sm:$0xff]
      %v519 = vld [vmem:[%s515 + $0x14] sm:$0xf]
      %v520 = vld [vmem:[%s515 + $0x18] sm:$0xff]
      %v521 = vld [vmem:[%s515 + $0x20] sm:$0xf]
      %v522 = vld [vmem:[%s515 + $0x24] sm:$0xff]
      %v523 = vld [vmem:[%s515 + $0x2c] sm:$0xf]
      %v524 = vld [vmem:[%s515 + $0x30] sm:$0xff]
      %v525 = vld [vmem:[%s515 + $0x38] sm:$0xf]
      %v526 = vld [vmem:[%s515 + $0x3c] sm:$0xff]
      %v527 = vld [vmem:[%s515 + $0x44] sm:$0xf]
      %v528 = vld [vmem:[%s515 + $0x48] sm:$0xff]
      %v529 = vld [vmem:[%s515 + $0x50] sm:$0xf]
      %v530 = vld [vmem:[%s515 + $0x54] sm:$0xff]
      %v531 = vld [vmem:[%s515 + $0x5c] sm:$0xf]
      %v532 = vld [vmem:[%s515 + $0x60] sm:$0xff]
      %v533 = vld [vmem:[%s515 + $0x68] sm:$0xf]
      %v534 = vld [vmem:[%s515 + $0x6c] sm:$0xff]
      %v535 = vld [vmem:[%s515 + $0x74] sm:$0xf]
      %v536 = vld [vmem:[%s515 + $0x78] sm:$0xff]
      %v537 = vld [vmem:[%s515 + $0x80] sm:$0xf]
      %v538 = vld [vmem:[%s515 + $0x84] sm:$0xff]
      %v539 = vld [vmem:[%s515 + $0x8c] sm:$0xf]
      %v540 = vld [vmem:[%s515 + $0x90] sm:$0xff]
      %v541 = vld [vmem:[%s515 + $0x98] sm:$0xf]
      %v542 = vld [vmem:[%s515 + $0x9c] sm:$0xff]
      %v543 = vld [vmem:[%s515 + $0xa4] sm:$0xf]
      %v544 = vld [vmem:[%s515 + $0xa8] sm:$0xff]
      %v545 = vld [vmem:[%s515 + $0xb0] sm:$0xf]
      %v546 = vld [vmem:[%s515 + $0xb4] sm:$0xff]
      %v547 = vld [vmem:[%s515 + $0xbc] sm:$0xf]
      %vm548 = vsmask.f32 7424
      %v550 = vshrl.u32 %v474, 16
      %v552 = vshll.u32 %v474, 16
      %v554 = vrot.slane %v552, 1
      %v555 = vor.u32 %v550, %v554
      %v557 = vshll.u32 %v475, 16
      %v559 = vrot.slane %v557, 1
      %v560 = vsel %vm548, %v555, %v559
      %v561 = vshrl.u32 %v475, 16
      %v563 = vor.u32 %v561, %v559
      %v565 = vshll.u32 %v476, 16
      %v567 = vrot.slane %v565, 1
      %v568 = vsel %vm548, %v563, %v567
      %v569 = vshrl.u32 %v476, 16
      %v571 = vor.u32 %v569, %v567
      %v573 = vshll.u32 %v477, 16
      %v575 = vrot.slane %v573, 1
      %v576 = vsel %vm548, %v571, %v575
      %v577 = vshrl.u32 %v477, 16
      %v579 = vor.u32 %v577, %v575
      %v581 = vshll.u32 %v478, 16
      %v583 = vrot.slane %v581, 1
      %v584 = vsel %vm548, %v579, %v583
      %v585 = vshrl.u32 %v478, 16
      %v587 = vor.u32 %v585, %v583
      %v589 = vshll.u32 %v479, 16
      %v591 = vrot.slane %v589, 1
      %v592 = vsel %vm548, %v587, %v591
      %v593 = vshrl.u32 %v479, 16
      %v595 = vor.u32 %v593, %v591
      %v597 = vshll.u32 %v480, 16
      %v599 = vrot.slane %v597, 1
      %v600 = vsel %vm548, %v595, %v599
      %v601 = vshrl.u32 %v480, 16
      %v603 = vor.u32 %v601, %v599
      %v605 = vshll.u32 %v481, 16
      %v607 = vrot.slane %v605, 1
      %v608 = vsel %vm548, %v603, %v607
      %v609 = vshrl.u32 %v481, 16
      %v611 = vor.u32 %v609, %v607
      %v613 = vshll.u32 %v514, 16
      %v615 = vrot.slane %v613, 1
      %v616 = vsel %vm548, %v611, %v615
      %v657 = vunpack.c.l.b16 %v516
      %v658 = vunpack.c.h.b16 %v516
      %v659 = vunpack.c.l.b16 %v517
      %v660 = vunpack.c.l.b16 %v518
      %v661 = vunpack.c.h.b16 %v518
      %v662 = vunpack.c.l.b16 %v519
      %v663 = vunpack.c.l.b16 %v520
      %v664 = vunpack.c.h.b16 %v520
      %v665 = vunpack.c.l.b16 %v521
      %v666 = vunpack.c.l.b16 %v522
      %v667 = vunpack.c.h.b16 %v522
      %v668 = vunpack.c.l.b16 %v523
      %v669 = vunpack.c.l.b16 %v524
      %v670 = vunpack.c.h.b16 %v524
      %v671 = vunpack.c.l.b16 %v525
      %v672 = vunpack.c.l.b16 %v526
      %v673 = vunpack.c.h.b16 %v526
      %v674 = vunpack.c.l.b16 %v527
      %v675 = vunpack.c.l.b16 %v528
      %v676 = vunpack.c.h.b16 %v528
      %v677 = vunpack.c.l.b16 %v529
      %v678 = vunpack.c.l.b16 %v530
      %v679 = vunpack.c.h.b16 %v530
      %v680 = vunpack.c.l.b16 %v531
      %v681 = vunpack.c.l.b16 %v532
      %v682 = vunpack.c.h.b16 %v532
      %v683 = vunpack.c.l.b16 %v533
      %v684 = vunpack.c.l.b16 %v534
      %v685 = vunpack.c.h.b16 %v534
      %v686 = vunpack.c.l.b16 %v535
      %v687 = vunpack.c.l.b16 %v536
      %v688 = vunpack.c.h.b16 %v536
      %v689 = vunpack.c.l.b16 %v537
      %v690 = vunpack.c.l.b16 %v538
      %v691 = vunpack.c.h.b16 %v538
      %v692 = vunpack.c.l.b16 %v539
      %v693 = vunpack.c.l.b16 %v540
      %v694 = vunpack.c.h.b16 %v540
      %v695 = vunpack.c.l.b16 %v541
      %v696 = vunpack.c.l.b16 %v542
      %v697 = vunpack.c.h.b16 %v542
      %v698 = vunpack.c.l.b16 %v543
      %v699 = vunpack.c.l.b16 %v544
      %v700 = vunpack.c.h.b16 %v544
      %v701 = vunpack.c.l.b16 %v545
      %v702 = vunpack.c.l.b16 %v546
      %v703 = vunpack.c.h.b16 %v546
      %v704 = vunpack.c.l.b16 %v547
      %v705 = vpack.c.b16 %v660, %v657
      %v706 = vpack.c.b16 %v661, %v658
      %v707 = vpack.c.b16 %v662, %v659
      %v708 = vpack.c.b16 %v666, %v663
      %v709 = vpack.c.b16 %v667, %v664
      %v710 = vpack.c.b16 %v668, %v665
      %v711 = vpack.c.b16 %v672, %v669
      %v712 = vpack.c.b16 %v673, %v670
      %v713 = vpack.c.b16 %v674, %v671
      %v714 = vpack.c.b16 %v678, %v675
      %v715 = vpack.c.b16 %v679, %v676
      %v716 = vpack.c.b16 %v680, %v677
      %v717 = vpack.c.b16 %v684, %v681
      %v718 = vpack.c.b16 %v685, %v682
      %v719 = vpack.c.b16 %v686, %v683
      %v720 = vpack.c.b16 %v690, %v687
      %v721 = vpack.c.b16 %v691, %v688
      %v722 = vpack.c.b16 %v692, %v689
      %v723 = vpack.c.b16 %v696, %v693
      %v724 = vpack.c.b16 %v697, %v694
      %v725 = vpack.c.b16 %v698, %v695
      %v726 = vpack.c.b16 %v702, %v699
      %v727 = vpack.c.b16 %v703, %v700
      %v728 = vpack.c.b16 %v704, %v701
      %753 = vmatprep.subr.bf16.mxu0 %v706
      %754 = vmatpush1.bf16.msra.mxu0 %v705
      %755 = vmatprep.subr.bf16.mxu0 %v709
      %756 = vmatpush1.bf16.msra.mxu0 %v708
      %757 = vmatprep.subr.bf16.mxu0 %v712
      %758 = vmatpush1.bf16.msra.mxu0 %v711
      %759 = vmatprep.subr.bf16.mxu0 %v715
      %760 = vmatpush1.bf16.msra.mxu0 %v714
      %761 = vmatprep.subr.bf16.mxu0 %v718
      %762 = vmatpush1.bf16.msra.mxu0 %v717
      %763 = vmatprep.subr.bf16.mxu0 %v721
      %764 = vmatpush1.bf16.msra.mxu0 %v720
      %765 = vmatprep.subr.bf16.mxu0 %v724
      %766 = vmatpush1.bf16.msra.mxu0 %v723
      %767 = vmatprep.subr.bf16.mxu0 %v727
      %768 = vmatpush1.bf16.msra.mxu0 %v726
      %769 = vmatprep.subr.bf16.mxu0 0
      %770 = vmatpush1.bf16.msra.mxu0 0
      %771 = vmatprep.subr.bf16.mxu0 0
      %772 = vmatpush1.bf16.msra.mxu0 0
      %773 = vmatprep.subr.bf16.mxu0 0
      %774 = vmatpush1.bf16.msra.mxu0 0
      %775 = vmatprep.subr.bf16.mxu0 0
      %776 = vmatpush1.bf16.msra.mxu0 0
      %777 = vmatprep.subr.bf16.mxu0 0
      %778 = vmatpush1.bf16.msra.mxu0 0
      %779 = vmatprep.subr.bf16.mxu0 0
      %780 = vmatpush1.bf16.msra.mxu0 0
      %781 = vmatprep.subr.bf16.mxu0 0
      %782 = vmatpush1.bf16.msra.mxu0 0
      %783 = vmatprep.subr.bf16.mxu0 0
      %784 = vmatpush1.bf16.msra.mxu0 0
      %785 = vmatprep.mubr.bf16.mxu0 0
      %786 = vmatmul.mubr.bf16.gmra.mrb[0].mxu0 %v560
      %v787 = vpop.f32.mrb[0].mxu0
      %v788 = vadd.f32 0.0, %v787
      %v789 = vpop.f32.mrb[0].mxu0
      %v790 = vadd.f32 0.0, %v789
      %v791 = vpop.f32.mrb[0].mxu0
      %v792 = vadd.f32 0.0, %v791
      %v793 = vpop.f32.mrb[0].mxu0
      %v794 = vadd.f32 0.0, %v793
      %795 = vmatprep.mubr.bf16.mxu0 0
      %796 = vmatmul.mubr.bf16.gmra.mrb[0].mxu0 %v568
      %v797 = vpop.f32.mrb[0].mxu0
      %v798 = vadd.f32 0.0, %v797
      %v799 = vpop.f32.mrb[0].mxu0
      %v800 = vadd.f32 0.0, %v799
      %v801 = vpop.f32.mrb[0].mxu0
      %v802 = vadd.f32 0.0, %v801
      %v803 = vpop.f32.mrb[0].mxu0
      %v804 = vadd.f32 0.0, %v803
      %805 = vmatprep.mubr.bf16.mxu0 0
      %806 = vmatmul.mubr.bf16.gmra.mrb[0].mxu0 %v576
      %v807 = vpop.f32.mrb[0].mxu0
      %v808 = vadd.f32 0.0, %v807
      %v809 = vpop.f32.mrb[0].mxu0
      %v810 = vadd.f32 0.0, %v809
      %v811 = vpop.f32.mrb[0].mxu0
      %v812 = vadd.f32 0.0, %v811
      %v813 = vpop.f32.mrb[0].mxu0
      %v814 = vadd.f32 0.0, %v813
      %815 = vmatprep.mubr.bf16.mxu0 0
      %816 = vmatmul.mubr.bf16.gmra.mrb[0].mxu0 %v584
      %v817 = vpop.f32.mrb[0].mxu0
      %v818 = vadd.f32 0.0, %v817
      %v819 = vpop.f32.mrb[0].mxu0
      %v820 = vadd.f32 0.0, %v819
      %v821 = vpop.f32.mrb[0].mxu0
      %v822 = vadd.f32 0.0, %v821
      %v823 = vpop.f32.mrb[0].mxu0
      %v824 = vadd.f32 0.0, %v823
      %825 = vmatprep.mubr.bf16.mxu0 0
      %826 = vmatmul.mubr.bf16.gmra.mrb[0].mxu0 %v592
      %v827 = vpop.f32.mrb[0].mxu0
      %v828 = vadd.f32 0.0, %v827
      %v829 = vpop.f32.mrb[0].mxu0
      %v830 = vadd.f32 0.0, %v829
      %v831 = vpop.f32.mrb[0].mxu0
      %v832 = vadd.f32 0.0, %v831
      %v833 = vpop.f32.mrb[0].mxu0
      %v834 = vadd.f32 0.0, %v833
      %835 = vmatprep.mubr.bf16.mxu0 0
      %836 = vmatmul.mubr.bf16.gmra.mrb[0].mxu0 %v600
      %v837 = vpop.f32.mrb[0].mxu0
      %v838 = vadd.f32 0.0, %v837
      %v839 = vpop.f32.mrb[0].mxu0
      %v840 = vadd.f32 0.0, %v839
      %v841 = vpop.f32.mrb[0].mxu0
      %v842 = vadd.f32 0.0, %v841
      %v843 = vpop.f32.mrb[0].mxu0
      %v844 = vadd.f32 0.0, %v843
      %845 = vmatprep.mubr.bf16.mxu0 0
      %846 = vmatmul.mubr.bf16.gmra.mrb[0].mxu0 %v608
      %v847 = vpop.f32.mrb[0].mxu0
      %v848 = vadd.f32 0.0, %v847
      %v849 = vpop.f32.mrb[0].mxu0
      %v850 = vadd.f32 0.0, %v849
      %v851 = vpop.f32.mrb[0].mxu0
      %v852 = vadd.f32 0.0, %v851
      %v853 = vpop.f32.mrb[0].mxu0
      %v854 = vadd.f32 0.0, %v853
      %855 = vmatprep.mubr.bf16.mxu0 0
      %856 = vmatmul.mubr.bf16.gmra.mrb[0].mxu0 %v616
      %v857 = vpop.f32.mrb[0].mxu0
      %v858 = vadd.f32 0.0, %v857
      %v859 = vpop.f32.mrb[0].mxu0
      %v860 = vadd.f32 0.0, %v859
      %v861 = vpop.f32.mrb[0].mxu0
      %v862 = vadd.f32 0.0, %v861
      %v863 = vpop.f32.mrb[0].mxu0
      %v864 = vadd.f32 0.0, %v863
      %865 = vdwg.mxu0
      %866 = vmatprep.subr.bf16.mxu0 0
      %867 = vmatpush1.bf16.msra.mxu0 %v707
      %868 = vmatprep.subr.bf16.mxu0 0
      %869 = vmatpush1.bf16.msra.mxu0 %v710
      %870 = vmatprep.subr.bf16.mxu0 0
      %871 = vmatpush1.bf16.msra.mxu0 %v713
      %872 = vmatprep.subr.bf16.mxu0 0
      %873 = vmatpush1.bf16.msra.mxu0 %v716
      %874 = vmatprep.subr.bf16.mxu0 0
      %875 = vmatpush1.bf16.msra.mxu0 %v719
      %876 = vmatprep.subr.bf16.mxu0 0
      %877 = vmatpush1.bf16.msra.mxu0 %v722
      %878 = vmatprep.subr.bf16.mxu0 0
      %879 = vmatpush1.bf16.msra.mxu0 %v725
      %880 = vmatprep.subr.bf16.mxu0 0
      %881 = vmatpush1.bf16.msra.mxu0 %v728
      %882 = vmatprep.subr.bf16.mxu0 0
      %883 = vmatpush1.bf16.msra.mxu0 0
      %884 = vmatprep.subr.bf16.mxu0 0
      %885 = vmatpush1.bf16.msra.mxu0 0
      %886 = vmatprep.subr.bf16.mxu0 0
      %887 = vmatpush1.bf16.msra.mxu0 0
      %888 = vmatprep.subr.bf16.mxu0 0
      %889 = vmatpush1.bf16.msra.mxu0 0
      %890 = vmatprep.subr.bf16.mxu0 0
      %891 = vmatpush1.bf16.msra.mxu0 0
      %892 = vmatprep.subr.bf16.mxu0 0
      %893 = vmatpush1.bf16.msra.mxu0 0
      %894 = vmatprep.subr.bf16.mxu0 0
      %895 = vmatpush1.bf16.msra.mxu0 0
      %896 = vmatprep.subr.bf16.mxu0 0
      %897 = vmatpush1.bf16.msra.mxu0 0
      %898 = vmatprep.mubr.bf16.mxu0 0
      %899 = vmatmul.mubr.bf16.gmra.mrb[0].mxu0 %v560
      %v900 = vpop.f32.mrb[0].mxu0
      %v901 = vadd.f32 0.0, %v900
      %v902 = vpop.f32.mrb[0].mxu0
      %v903 = vpop.f32.mrb[0].mxu0
      %v904 = vadd.f32 0.0, %v903
      %v905 = vpop.f32.mrb[0].mxu0
      %906 = vmatprep.mubr.bf16.mxu0 0
      %907 = vmatmul.mubr.bf16.gmra.mrb[0].mxu0 %v568
      %v908 = vpop.f32.mrb[0].mxu0
      %v909 = vadd.f32 0.0, %v908
      %v910 = vpop.f32.mrb[0].mxu0
      %v911 = vpop.f32.mrb[0].mxu0
      %v912 = vadd.f32 0.0, %v911
      %v913 = vpop.f32.mrb[0].mxu0
      %914 = vmatprep.mubr.bf16.mxu0 0
      %915 = vmatmul.mubr.bf16.gmra.mrb[0].mxu0 %v576
      %v916 = vpop.f32.mrb[0].mxu0
      %v917 = vadd.f32 0.0, %v916
      %v918 = vpop.f32.mrb[0].mxu0
      %v919 = vpop.f32.mrb[0].mxu0
      %v920 = vadd.f32 0.0, %v919
      %v921 = vpop.f32.mrb[0].mxu0
      %922 = vmatprep.mubr.bf16.mxu0 0
      %923 = vmatmul.mubr.bf16.gmra.mrb[0].mxu0 %v584
      %v924 = vpop.f32.mrb[0].mxu0
      %v925 = vadd.f32 0.0, %v924
      %v926 = vpop.f32.mrb[0].mxu0
      %v927 = vpop.f32.mrb[0].mxu0
      %v928 = vadd.f32 0.0, %v927
      %v929 = vpop.f32.mrb[0].mxu0
      %930 = vmatprep.mubr.bf16.mxu0 0
      %931 = vmatmul.mubr.bf16.gmra.mrb[0].mxu0 %v592
      %v932 = vpop.f32.mrb[0].mxu0
      %v933 = vadd.f32 0.0, %v932
      %v934 = vpop.f32.mrb[0].mxu0
      %v935 = vpop.f32.mrb[0].mxu0
      %v936 = vadd.f32 0.0, %v935
      %v937 = vpop.f32.mrb[0].mxu0
      %938 = vmatprep.mubr.bf16.mxu0 0
      %939 = vmatmul.mubr.bf16.gmra.mrb[0].mxu0 %v600
      %v940 = vpop.f32.mrb[0].mxu0
      %v941 = vadd.f32 0.0, %v940
      %v942 = vpop.f32.mrb[0].mxu0
      %v943 = vpop.f32.mrb[0].mxu0
      %v944 = vadd.f32 0.0, %v943
      %v945 = vpop.f32.mrb[0].mxu0
      %946 = vmatprep.mubr.bf16.mxu0 0
      %947 = vmatmul.mubr.bf16.gmra.mrb[0].mxu0 %v608
      %v948 = vpop.f32.mrb[0].mxu0
      %v949 = vadd.f32 0.0, %v948
      %v950 = vpop.f32.mrb[0].mxu0
      %v951 = vpop.f32.mrb[0].mxu0
      %v952 = vadd.f32 0.0, %v951
      %v953 = vpop.f32.mrb[0].mxu0
      %954 = vmatprep.mubr.bf16.mxu0 0
      %955 = vmatmul.mubr.bf16.gmra.mrb[0].mxu0 %v616
      %v956 = vpop.f32.mrb[0].mxu0
      %v957 = vadd.f32 0.0, %v956
      %v958 = vpop.f32.mrb[0].mxu0
      %v959 = vpop.f32.mrb[0].mxu0
      %v960 = vadd.f32 0.0, %v959
      %v961 = vpop.f32.mrb[0].mxu0
      %962 = vdwg.mxu0
      %v995 = vunpack.c.l.b16 %v482
      %v996 = vunpack.c.h.b16 %v482
      %v997 = vunpack.c.l.b16 %v483
      %v998 = vunpack.c.l.b16 %v484
      %v999 = vunpack.c.h.b16 %v484
      %v1000 = vunpack.c.l.b16 %v485
      %v1001 = vunpack.c.l.b16 %v486
      %v1002 = vunpack.c.h.b16 %v486
      %v1003 = vunpack.c.l.b16 %v487
      %v1004 = vunpack.c.l.b16 %v488
      %v1005 = vunpack.c.h.b16 %v488
      %v1006 = vunpack.c.l.b16 %v489
      %v1007 = vunpack.c.l.b16 %v490
      %v1008 = vunpack.c.h.b16 %v490
      %v1009 = vunpack.c.l.b16 %v491
      %v1010 = vunpack.c.l.b16 %v492
      %v1011 = vunpack.c.h.b16 %v492
      %v1012 = vunpack.c.l.b16 %v493
      %v1013 = vunpack.c.l.b16 %v494
      %v1014 = vunpack.c.h.b16 %v494
      %v1015 = vunpack.c.l.b16 %v495
      %v1016 = vunpack.c.l.b16 %v496
      %v1017 = vunpack.c.h.b16 %v496
      %v1018 = vunpack.c.l.b16 %v497
      %v1019 = vunpack.c.l.b16 %v498
      %v1020 = vunpack.c.h.b16 %v498
      %v1021 = vunpack.c.l.b16 %v499
      %v1022 = vunpack.c.l.b16 %v500
      %v1023 = vunpack.c.h.b16 %v500
      %v1024 = vunpack.c.l.b16 %v501
      %v1025 = vunpack.c.l.b16 %v502
      %v1026 = vunpack.c.h.b16 %v502
      %v1027 = vunpack.c.l.b16 %v503
      %v1028 = vunpack.c.l.b16 %v504
      %v1029 = vunpack.c.h.b16 %v504
      %v1030 = vunpack.c.l.b16 %v505
      %v1031 = vunpack.c.l.b16 %v506
      %v1032 = vunpack.c.h.b16 %v506
      %v1033 = vunpack.c.l.b16 %v507
      %v1034 = vunpack.c.l.b16 %v508
      %v1035 = vunpack.c.h.b16 %v508
      %v1036 = vunpack.c.l.b16 %v509
      %v1037 = vunpack.c.l.b16 %v510
      %v1038 = vunpack.c.h.b16 %v510
      %v1039 = vunpack.c.l.b16 %v511
      %v1040 = vunpack.c.l.b16 %v512
      %v1041 = vunpack.c.h.b16 %v512
      %v1042 = vunpack.c.l.b16 %v513
      %v1043 = vpack.c.b16 %v998, %v995
      %v1044 = vpack.c.b16 %v999, %v996
      %v1045 = vpack.c.b16 %v1000, %v997
      %v1046 = vpack.c.b16 %v1004, %v1001
      %v1047 = vpack.c.b16 %v1005, %v1002
      %v1048 = vpack.c.b16 %v1006, %v1003
      %v1049 = vpack.c.b16 %v1010, %v1007
      %v1050 = vpack.c.b16 %v1011, %v1008
      %v1051 = vpack.c.b16 %v1012, %v1009
      %v1052 = vpack.c.b16 %v1016, %v1013
      %v1053 = vpack.c.b16 %v1017, %v1014
      %v1054 = vpack.c.b16 %v1018, %v1015
      %v1055 = vpack.c.b16 %v1022, %v1019
      %v1056 = vpack.c.b16 %v1023, %v1020
      %v1057 = vpack.c.b16 %v1024, %v1021
      %v1058 = vpack.c.b16 %v1028, %v1025
      %v1059 = vpack.c.b16 %v1029, %v1026
      %v1060 = vpack.c.b16 %v1030, %v1027
      %v1061 = vpack.c.b16 %v1034, %v1031
      %v1062 = vpack.c.b16 %v1035, %v1032
      %v1063 = vpack.c.b16 %v1036, %v1033
      %v1064 = vpack.c.b16 %v1040, %v1037
      %v1065 = vpack.c.b16 %v1041, %v1038
      %v1066 = vpack.c.b16 %v1042, %v1039
      %1091 = vmatprep.subr.bf16.mxu0 %v1044
      %1092 = vmatpush1.bf16.msra.mxu0 %v1043
      %1093 = vmatprep.subr.bf16.mxu0 %v1047
      %1094 = vmatpush1.bf16.msra.mxu0 %v1046
      %1095 = vmatprep.subr.bf16.mxu0 %v1050
      %1096 = vmatpush1.bf16.msra.mxu0 %v1049
      %1097 = vmatprep.subr.bf16.mxu0 %v1053
      %1098 = vmatpush1.bf16.msra.mxu0 %v1052
      %1099 = vmatprep.subr.bf16.mxu0 %v1056
      %1100 = vmatpush1.bf16.msra.mxu0 %v1055
      %1101 = vmatprep.subr.bf16.mxu0 %v1059
      %1102 = vmatpush1.bf16.msra.mxu0 %v1058
      %1103 = vmatprep.subr.bf16.mxu0 %v1062
      %1104 = vmatpush1.bf16.msra.mxu0 %v1061
      %1105 = vmatprep.subr.bf16.mxu0 %v1065
      %1106 = vmatpush1.bf16.msra.mxu0 %v1064
      %1107 = vmatprep.subr.bf16.mxu0 0
      %1108 = vmatpush1.bf16.msra.mxu0 0
      %1109 = vmatprep.subr.bf16.mxu0 0
      %1110 = vmatpush1.bf16.msra.mxu0 0
      %1111 = vmatprep.subr.bf16.mxu0 0
      %1112 = vmatpush1.bf16.msra.mxu0 0
      %1113 = vmatprep.subr.bf16.mxu0 0
      %1114 = vmatpush1.bf16.msra.mxu0 0
      %1115 = vmatprep.subr.bf16.mxu0 0
      %1116 = vmatpush1.bf16.msra.mxu0 0
      %1117 = vmatprep.subr.bf16.mxu0 0
      %1118 = vmatpush1.bf16.msra.mxu0 0
      %1119 = vmatprep.subr.bf16.mxu0 0
      %1120 = vmatpush1.bf16.msra.mxu0 0
      %1121 = vmatprep.subr.bf16.mxu0 0
      %1122 = vmatpush1.bf16.msra.mxu0 0
      %1123 = vmatprep.mubr.bf16.mxu0 0
      %1124 = vmatmul.mubr.bf16.gmra.mrb[0].mxu0 %v474
      %v1125 = vpop.f32.mrb[0].mxu0
      %v1126 = vadd.f32 %v788, %v1125
      %v1127 = vpop.f32.mrb[0].mxu0
      %v1128 = vadd.f32 %v790, %v1127
      %v1129 = vpop.f32.mrb[0].mxu0
      %v1130 = vadd.f32 %v792, %v1129
      %v1131 = vpop.f32.mrb[0].mxu0
      %v1132 = vadd.f32 %v794, %v1131
      %1133 = vmatprep.mubr.bf16.mxu0 0
      %1134 = vmatmul.mubr.bf16.gmra.mrb[0].mxu0 %v475
      %v1135 = vpop.f32.mrb[0].mxu0
      %v1136 = vadd.f32 %v798, %v1135
      %v1137 = vpop.f32.mrb[0].mxu0
      %v1138 = vadd.f32 %v800, %v1137
      %v1139 = vpop.f32.mrb[0].mxu0
      %v1140 = vadd.f32 %v802, %v1139
      %v1141 = vpop.f32.mrb[0].mxu0
      %v1142 = vadd.f32 %v804, %v1141
      %1143 = vmatprep.mubr.bf16.mxu0 0
      %1144 = vmatmul.mubr.bf16.gmra.mrb[0].mxu0 %v476
      %v1145 = vpop.f32.mrb[0].mxu0
      %v1146 = vadd.f32 %v808, %v1145
      %v1147 = vpop.f32.mrb[0].mxu0
      %v1148 = vadd.f32 %v810, %v1147
      %v1149 = vpop.f32.mrb[0].mxu0
      %v1150 = vadd.f32 %v812, %v1149
      %v1151 = vpop.f32.mrb[0].mxu0
      %v1152 = vadd.f32 %v814, %v1151
      %1153 = vmatprep.mubr.bf16.mxu0 0
      %1154 = vmatmul.mubr.bf16.gmra.mrb[0].mxu0 %v477
      %v1155 = vpop.f32.mrb[0].mxu0
      %v1156 = vadd.f32 %v818, %v1155
      %v1157 = vpop.f32.mrb[0].mxu0
      %v1158 = vadd.f32 %v820, %v1157
      %v1159 = vpop.f32.mrb[0].mxu0
      %v1160 = vadd.f32 %v822, %v1159
      %v1161 = vpop.f32.mrb[0].mxu0
      %v1162 = vadd.f32 %v824, %v1161
      %1163 = vmatprep.mubr.bf16.mxu0 0
      %1164 = vmatmul.mubr.bf16.gmra.mrb[0].mxu0 %v478
      %v1165 = vpop.f32.mrb[0].mxu0
      %v1166 = vadd.f32 %v828, %v1165
      %v1167 = vpop.f32.mrb[0].mxu0
      %v1168 = vadd.f32 %v830, %v1167
      %v1169 = vpop.f32.mrb[0].mxu0
      %v1170 = vadd.f32 %v832, %v1169
      %v1171 = vpop.f32.mrb[0].mxu0
      %v1172 = vadd.f32 %v834, %v1171
      %1173 = vmatprep.mubr.bf16.mxu0 0
      %1174 = vmatmul.mubr.bf16.gmra.mrb[0].mxu0 %v479
      %v1175 = vpop.f32.mrb[0].mxu0
      %v1176 = vadd.f32 %v838, %v1175
      %v1177 = vpop.f32.mrb[0].mxu0
      %v1178 = vadd.f32 %v840, %v1177
      %v1179 = vpop.f32.mrb[0].mxu0
      %v1180 = vadd.f32 %v842, %v1179
      %v1181 = vpop.f32.mrb[0].mxu0
      %v1182 = vadd.f32 %v844, %v1181
      %1183 = vmatprep.mubr.bf16.mxu0 0
      %1184 = vmatmul.mubr.bf16.gmra.mrb[0].mxu0 %v480
      %v1185 = vpop.f32.mrb[0].mxu0
      %v1186 = vadd.f32 %v848, %v1185
      %v1187 = vpop.f32.mrb[0].mxu0
      %v1188 = vadd.f32 %v850, %v1187
      %v1189 = vpop.f32.mrb[0].mxu0
      %v1190 = vadd.f32 %v852, %v1189
      %v1191 = vpop.f32.mrb[0].mxu0
      %v1192 = vadd.f32 %v854, %v1191
      %1193 = vmatprep.mubr.bf16.mxu0 0
      %1194 = vmatmul.mubr.bf16.gmra.mrb[0].mxu0 %v481
      %v1195 = vpop.f32.mrb[0].mxu0
      %v1196 = vadd.f32 %v858, %v1195
      %v1197 = vpop.f32.mrb[0].mxu0
      %v1198 = vadd.f32 %v860, %v1197
      %v1199 = vpop.f32.mrb[0].mxu0
      %v1200 = vadd.f32 %v862, %v1199
      %v1201 = vpop.f32.mrb[0].mxu0
      %v1202 = vadd.f32 %v864, %v1201
      %1203 = vdwg.mxu0
      %1204 = vmatprep.subr.bf16.mxu0 0
      %1205 = vmatpush1.bf16.msra.mxu0 %v1045
      %1206 = vmatprep.subr.bf16.mxu0 0
      %1207 = vmatpush1.bf16.msra.mxu0 %v1048
      %1208 = vmatprep.subr.bf16.mxu0 0
      %1209 = vmatpush1.bf16.msra.mxu0 %v1051
      %1210 = vmatprep.subr.bf16.mxu0 0
      %1211 = vmatpush1.bf16.msra.mxu0 %v1054
      %1212 = vmatprep.subr.bf16.mxu0 0
      %1213 = vmatpush1.bf16.msra.mxu0 %v1057
      %1214 = vmatprep.subr.bf16.mxu0 0
      %1215 = vmatpush1.bf16.msra.mxu0 %v1060
      %1216 = vmatprep.subr.bf16.mxu0 0
      %1217 = vmatpush1.bf16.msra.mxu0 %v1063
      %1218 = vmatprep.subr.bf16.mxu0 0
      %1219 = vmatpush1.bf16.msra.mxu0 %v1066
      %1220 = vmatprep.subr.bf16.mxu0 0
      %1221 = vmatpush1.bf16.msra.mxu0 0
      %1222 = vmatprep.subr.bf16.mxu0 0
      %1223 = vmatpush1.bf16.msra.mxu0 0
      %1224 = vmatprep.subr.bf16.mxu0 0
      %1225 = vmatpush1.bf16.msra.mxu0 0
      %1226 = vmatprep.subr.bf16.mxu0 0
      %1227 = vmatpush1.bf16.msra.mxu0 0
      %1228 = vmatprep.subr.bf16.mxu0 0
      %1229 = vmatpush1.bf16.msra.mxu0 0
      %1230 = vmatprep.subr.bf16.mxu0 0
      %1231 = vmatpush1.bf16.msra.mxu0 0
      %1232 = vmatprep.subr.bf16.mxu0 0
      %1233 = vmatpush1.bf16.msra.mxu0 0
      %1234 = vmatprep.subr.bf16.mxu0 0
      %1235 = vmatpush1.bf16.msra.mxu0 0
      %1236 = vmatprep.mubr.bf16.mxu0 0
      %1237 = vmatmul.mubr.bf16.gmra.mrb[0].mxu0 %v474
      %v1238 = vpop.f32.mrb[0].mxu0
      %v1239 = vadd.f32 %v901, %v1238
      %v1240 = vpop.f32.mrb[0].mxu0
      %v1241 = vpop.f32.mrb[0].mxu0
      %v1242 = vadd.f32 %v904, %v1241
      %v1243 = vpop.f32.mrb[0].mxu0
      %1244 = vmatprep.mubr.bf16.mxu0 0
      %1245 = vmatmul.mubr.bf16.gmra.mrb[0].mxu0 %v475
      %v1246 = vpop.f32.mrb[0].mxu0
      %v1247 = vadd.f32 %v909, %v1246
      %v1248 = vpop.f32.mrb[0].mxu0
      %v1249 = vpop.f32.mrb[0].mxu0
      %v1250 = vadd.f32 %v912, %v1249
      %v1251 = vpop.f32.mrb[0].mxu0
      %1252 = vmatprep.mubr.bf16.mxu0 0
      %1253 = vmatmul.mubr.bf16.gmra.mrb[0].mxu0 %v476
      %v1254 = vpop.f32.mrb[0].mxu0
      %v1255 = vadd.f32 %v917, %v1254
      %v1256 = vpop.f32.mrb[0].mxu0
      %v1257 = vpop.f32.mrb[0].mxu0
      %v1258 = vadd.f32 %v920, %v1257
      %v1259 = vpop.f32.mrb[0].mxu0
      %1260 = vmatprep.mubr.bf16.mxu0 0
      %1261 = vmatmul.mubr.bf16.gmra.mrb[0].mxu0 %v477
      %v1262 = vpop.f32.mrb[0].mxu0
      %v1263 = vadd.f32 %v925, %v1262
      %v1264 = vpop.f32.mrb[0].mxu0
      %v1265 = vpop.f32.mrb[0].mxu0
      %v1266 = vadd.f32 %v928, %v1265
      %v1267 = vpop.f32.mrb[0].mxu0
      %1268 = vmatprep.mubr.bf16.mxu0 0
      %1269 = vmatmul.mubr.bf16.gmra.mrb[0].mxu0 %v478
      %v1270 = vpop.f32.mrb[0].mxu0
      %v1271 = vadd.f32 %v933, %v1270
      %v1272 = vpop.f32.mrb[0].mxu0
      %v1273 = vpop.f32.mrb[0].mxu0
      %v1274 = vadd.f32 %v936, %v1273
      %v1275 = vpop.f32.mrb[0].mxu0
      %1276 = vmatprep.mubr.bf16.mxu0 0
      %1277 = vmatmul.mubr.bf16.gmra.mrb[0].mxu0 %v479
      %v1278 = vpop.f32.mrb[0].mxu0
      %v1279 = vadd.f32 %v941, %v1278
      %v1280 = vpop.f32.mrb[0].mxu0
      %v1281 = vpop.f32.mrb[0].mxu0
      %v1282 = vadd.f32 %v944, %v1281
      %v1283 = vpop.f32.mrb[0].mxu0
      %1284 = vmatprep.mubr.bf16.mxu0 0
      %1285 = vmatmul.mubr.bf16.gmra.mrb[0].mxu0 %v480
      %v1286 = vpop.f32.mrb[0].mxu0
      %v1287 = vadd.f32 %v949, %v1286
      %v1288 = vpop.f32.mrb[0].mxu0
      %v1289 = vpop.f32.mrb[0].mxu0
      %v1290 = vadd.f32 %v952, %v1289
      %v1291 = vpop.f32.mrb[0].mxu0
      %1292 = vmatprep.mubr.bf16.mxu0 0
      %1293 = vmatmul.mubr.bf16.gmra.mrb[0].mxu0 %v481
      %v1294 = vpop.f32.mrb[0].mxu0
      %v1295 = vadd.f32 %v957, %v1294
      %v1296 = vpop.f32.mrb[0].mxu0
      %v1297 = vpop.f32.mrb[0].mxu0
      %v1298 = vadd.f32 %v960, %v1297
      %v1299 = vpop.f32.mrb[0].mxu0
      %1300 = vdwg.mxu0
      %s1301 = scalar_lea.vmem %s2, 384
      %v1302 = vld [vmem:[%s1301] sm:$0xff]
      %v1303 = vld [vmem:[%s1301 + $0x8] sm:$0xf]
      %v1304 = vld [vmem:[%s1301 + $0xc] sm:$0xff]
      %v1305 = vld [vmem:[%s1301 + $0x14] sm:$0xf]
      %v1306 = vld [vmem:[%s1301 + $0x18] sm:$0xff]
      %v1307 = vld [vmem:[%s1301 + $0x20] sm:$0xf]
      %v1308 = vld [vmem:[%s1301 + $0x24] sm:$0xff]
      %v1309 = vld [vmem:[%s1301 + $0x2c] sm:$0xf]
      %v1310 = vld [vmem:[%s1301 + $0x30] sm:$0xff]
      %v1311 = vld [vmem:[%s1301 + $0x38] sm:$0xf]
      %v1312 = vld [vmem:[%s1301 + $0x3c] sm:$0xff]
      %v1313 = vld [vmem:[%s1301 + $0x44] sm:$0xf]
      %v1314 = vld [vmem:[%s1301 + $0x48] sm:$0xff]
      %v1315 = vld [vmem:[%s1301 + $0x50] sm:$0xf]
      %v1316 = vld [vmem:[%s1301 + $0x54] sm:$0xff]
      %v1317 = vld [vmem:[%s1301 + $0x5c] sm:$0xf]
      %v1318 = vld [vmem:[%s1301 + $0x60] sm:$0xff]
      %v1319 = vld [vmem:[%s1301 + $0x68] sm:$0xf]
      %v1320 = vld [vmem:[%s1301 + $0x6c] sm:$0xff]
      %v1321 = vld [vmem:[%s1301 + $0x74] sm:$0xf]
      %v1322 = vld [vmem:[%s1301 + $0x78] sm:$0xff]
      %v1323 = vld [vmem:[%s1301 + $0x80] sm:$0xf]
      %v1324 = vld [vmem:[%s1301 + $0x84] sm:$0xff]
      %v1325 = vld [vmem:[%s1301 + $0x8c] sm:$0xf]
      %v1326 = vld [vmem:[%s1301 + $0x90] sm:$0xff]
      %v1327 = vld [vmem:[%s1301 + $0x98] sm:$0xf]
      %v1328 = vld [vmem:[%s1301 + $0x9c] sm:$0xff]
      %v1329 = vld [vmem:[%s1301 + $0xa4] sm:$0xf]
      %v1330 = vld [vmem:[%s1301 + $0xa8] sm:$0xff]
      %v1331 = vld [vmem:[%s1301 + $0xb0] sm:$0xf]
      %v1332 = vld [vmem:[%s1301 + $0xb4] sm:$0xff]
      %v1333 = vld [vmem:[%s1301 + $0xbc] sm:$0xf]
      %vm1343 = vcmask 1046528
      %v1344 = vrot.slane %v474, 1
      %v1345 = vrot.slane %v475, 1
      %v1346 = vsel %vm1343, %v1344, %v1345
      %v1347 = vrot.slane %v476, 1
      %v1348 = vsel %vm1343, %v1345, %v1347
      %v1349 = vrot.slane %v477, 1
      %v1350 = vsel %vm1343, %v1347, %v1349
      %v1351 = vrot.slane %v478, 1
      %v1352 = vsel %vm1343, %v1349, %v1351
      %v1353 = vrot.slane %v479, 1
      %v1354 = vsel %vm1343, %v1351, %v1353
      %v1355 = vrot.slane %v480, 1
      %v1356 = vsel %vm1343, %v1353, %v1355
      %v1357 = vrot.slane %v481, 1
      %v1358 = vsel %vm1343, %v1355, %v1357
      %v1359 = vrot.slane %v514, 1
      %v1360 = vsel %vm1343, %v1357, %v1359
      %v1401 = vunpack.c.l.b16 %v1302
      %v1402 = vunpack.c.h.b16 %v1302
      %v1403 = vunpack.c.l.b16 %v1303
      %v1404 = vunpack.c.l.b16 %v1304
      %v1405 = vunpack.c.h.b16 %v1304
      %v1406 = vunpack.c.l.b16 %v1305
      %v1407 = vunpack.c.l.b16 %v1306
      %v1408 = vunpack.c.h.b16 %v1306
      %v1409 = vunpack.c.l.b16 %v1307
      %v1410 = vunpack.c.l.b16 %v1308
      %v1411 = vunpack.c.h.b16 %v1308
      %v1412 = vunpack.c.l.b16 %v1309
      %v1413 = vunpack.c.l.b16 %v1310
      %v1414 = vunpack.c.h.b16 %v1310
      %v1415 = vunpack.c.l.b16 %v1311
      %v1416 = vunpack.c.l.b16 %v1312
      %v1417 = vunpack.c.h.b16 %v1312
      %v1418 = vunpack.c.l.b16 %v1313
      %v1419 = vunpack.c.l.b16 %v1314
      %v1420 = vunpack.c.h.b16 %v1314
      %v1421 = vunpack.c.l.b16 %v1315
      %v1422 = vunpack.c.l.b16 %v1316
      %v1423 = vunpack.c.h.b16 %v1316
      %v1424 = vunpack.c.l.b16 %v1317
      %v1425 = vunpack.c.l.b16 %v1318
      %v1426 = vunpack.c.h.b16 %v1318
      %v1427 = vunpack.c.l.b16 %v1319
      %v1428 = vunpack.c.l.b16 %v1320
      %v1429 = vunpack.c.h.b16 %v1320
      %v1430 = vunpack.c.l.b16 %v1321
      %v1431 = vunpack.c.l.b16 %v1322
      %v1432 = vunpack.c.h.b16 %v1322
      %v1433 = vunpack.c.l.b16 %v1323
      %v1434 = vunpack.c.l.b16 %v1324
      %v1435 = vunpack.c.h.b16 %v1324
      %v1436 = vunpack.c.l.b16 %v1325
      %v1437 = vunpack.c.l.b16 %v1326
      %v1438 = vunpack.c.h.b16 %v1326
      %v1439 = vunpack.c.l.b16 %v1327
      %v1440 = vunpack.c.l.b16 %v1328
      %v1441 = vunpack.c.h.b16 %v1328
      %v1442 = vunpack.c.l.b16 %v1329
      %v1443 = vunpack.c.l.b16 %v1330
      %v1444 = vunpack.c.h.b16 %v1330
      %v1445 = vunpack.c.l.b16 %v1331
      %v1446 = vunpack.c.l.b16 %v1332
      %v1447 = vunpack.c.h.b16 %v1332
      %v1448 = vunpack.c.l.b16 %v1333
      %v1449 = vpack.c.b16 %v1404, %v1401
      %v1450 = vpack.c.b16 %v1405, %v1402
      %v1451 = vpack.c.b16 %v1406, %v1403
      %v1452 = vpack.c.b16 %v1410, %v1407
      %v1453 = vpack.c.b16 %v1411, %v1408
      %v1454 = vpack.c.b16 %v1412, %v1409
      %v1455 = vpack.c.b16 %v1416, %v1413
      %v1456 = vpack.c.b16 %v1417, %v1414
      %v1457 = vpack.c.b16 %v1418, %v1415
      %v1458 = vpack.c.b16 %v1422, %v1419
      %v1459 = vpack.c.b16 %v1423, %v1420
      %v1460 = vpack.c.b16 %v1424, %v1421
      %v1461 = vpack.c.b16 %v1428, %v1425
      %v1462 = vpack.c.b16 %v1429, %v1426
      %v1463 = vpack.c.b16 %v1430, %v1427
      %v1464 = vpack.c.b16 %v1434, %v1431
      %v1465 = vpack.c.b16 %v1435, %v1432
      %v1466 = vpack.c.b16 %v1436, %v1433
      %v1467 = vpack.c.b16 %v1440, %v1437
      %v1468 = vpack.c.b16 %v1441, %v1438
      %v1469 = vpack.c.b16 %v1442, %v1439
      %v1470 = vpack.c.b16 %v1446, %v1443
      %v1471 = vpack.c.b16 %v1447, %v1444
      %v1472 = vpack.c.b16 %v1448, %v1445
      %1497 = vmatprep.subr.bf16.mxu0 %v1450
      %1498 = vmatpush1.bf16.msra.mxu0 %v1449
      %1499 = vmatprep.subr.bf16.mxu0 %v1453
      %1500 = vmatpush1.bf16.msra.mxu0 %v1452
      %1501 = vmatprep.subr.bf16.mxu0 %v1456
      %1502 = vmatpush1.bf16.msra.mxu0 %v1455
      %1503 = vmatprep.subr.bf16.mxu0 %v1459
      %1504 = vmatpush1.bf16.msra.mxu0 %v1458
      %1505 = vmatprep.subr.bf16.mxu0 %v1462
      %1506 = vmatpush1.bf16.msra.mxu0 %v1461
      %1507 = vmatprep.subr.bf16.mxu0 %v1465
      %1508 = vmatpush1.bf16.msra.mxu0 %v1464
      %1509 = vmatprep.subr.bf16.mxu0 %v1468
      %1510 = vmatpush1.bf16.msra.mxu0 %v1467
      %1511 = vmatprep.subr.bf16.mxu0 %v1471
      %1512 = vmatpush1.bf16.msra.mxu0 %v1470
      %1513 = vmatprep.subr.bf16.mxu0 0
      %1514 = vmatpush1.bf16.msra.mxu0 0
      %1515 = vmatprep.subr.bf16.mxu0 0
      %1516 = vmatpush1.bf16.msra.mxu0 0
      %1517 = vmatprep.subr.bf16.mxu0 0
      %1518 = vmatpush1.bf16.msra.mxu0 0
      %1519 = vmatprep.subr.bf16.mxu0 0
      %1520 = vmatpush1.bf16.msra.mxu0 0
      %1521 = vmatprep.subr.bf16.mxu0 0
      %1522 = vmatpush1.bf16.msra.mxu0 0
      %1523 = vmatprep.subr.bf16.mxu0 0
      %1524 = vmatpush1.bf16.msra.mxu0 0
      %1525 = vmatprep.subr.bf16.mxu0 0
      %1526 = vmatpush1.bf16.msra.mxu0 0
      %1527 = vmatprep.subr.bf16.mxu0 0
      %1528 = vmatpush1.bf16.msra.mxu0 0
      %1529 = vmatprep.mubr.bf16.mxu0 0
      %1530 = vmatmul.mubr.bf16.gmra.mrb[0].mxu0 %v1346
      %v1531 = vpop.f32.mrb[0].mxu0
      %v1532 = vadd.f32 0.0, %v1531
      %v1533 = vpop.f32.mrb[0].mxu0
      %v1534 = vadd.f32 0.0, %v1533
      %v1535 = vpop.f32.mrb[0].mxu0
      %v1536 = vadd.f32 0.0, %v1535
      %v1537 = vpop.f32.mrb[0].mxu0
      %v1538 = vadd.f32 0.0, %v1537
      %1539 = vmatprep.mubr.bf16.mxu0 0
      %1540 = vmatmul.mubr.bf16.gmra.mrb[0].mxu0 %v1348
      %v1541 = vpop.f32.mrb[0].mxu0
      %v1542 = vadd.f32 0.0, %v1541
      %v1543 = vpop.f32.mrb[0].mxu0
      %v1544 = vadd.f32 0.0, %v1543
      %v1545 = vpop.f32.mrb[0].mxu0
      %v1546 = vadd.f32 0.0, %v1545
      %v1547 = vpop.f32.mrb[0].mxu0
      %v1548 = vadd.f32 0.0, %v1547
      %1549 = vmatprep.mubr.bf16.mxu0 0
      %1550 = vmatmul.mubr.bf16.gmra.mrb[0].mxu0 %v1350
      %v1551 = vpop.f32.mrb[0].mxu0
      %v1552 = vadd.f32 0.0, %v1551
      %v1553 = vpop.f32.mrb[0].mxu0
      %v1554 = vadd.f32 0.0, %v1553
      %v1555 = vpop.f32.mrb[0].mxu0
      %v1556 = vadd.f32 0.0, %v1555
      %v1557 = vpop.f32.mrb[0].mxu0
      %v1558 = vadd.f32 0.0, %v1557
      %1559 = vmatprep.mubr.bf16.mxu0 0
      %1560 = vmatmul.mubr.bf16.gmra.mrb[0].mxu0 %v1352
      %v1561 = vpop.f32.mrb[0].mxu0
      %v1562 = vadd.f32 0.0, %v1561
      %v1563 = vpop.f32.mrb[0].mxu0
      %v1564 = vadd.f32 0.0, %v1563
      %v1565 = vpop.f32.mrb[0].mxu0
      %v1566 = vadd.f32 0.0, %v1565
      %v1567 = vpop.f32.mrb[0].mxu0
      %v1568 = vadd.f32 0.0, %v1567
      %1569 = vmatprep.mubr.bf16.mxu0 0
      %1570 = vmatmul.mubr.bf16.gmra.mrb[0].mxu0 %v1354
      %v1571 = vpop.f32.mrb[0].mxu0
      %v1572 = vadd.f32 0.0, %v1571
      %v1573 = vpop.f32.mrb[0].mxu0
      %v1574 = vadd.f32 0.0, %v1573
      %v1575 = vpop.f32.mrb[0].mxu0
      %v1576 = vadd.f32 0.0, %v1575
      %v1577 = vpop.f32.mrb[0].mxu0
      %v1578 = vadd.f32 0.0, %v1577
      %1579 = vmatprep.mubr.bf16.mxu0 0
      %1580 = vmatmul.mubr.bf16.gmra.mrb[0].mxu0 %v1356
      %v1581 = vpop.f32.mrb[0].mxu0
      %v1582 = vadd.f32 0.0, %v1581
      %v1583 = vpop.f32.mrb[0].mxu0
      %v1584 = vadd.f32 0.0, %v1583
      %v1585 = vpop.f32.mrb[0].mxu0
      %v1586 = vadd.f32 0.0, %v1585
      %v1587 = vpop.f32.mrb[0].mxu0
      %v1588 = vadd.f32 0.0, %v1587
      %1589 = vmatprep.mubr.bf16.mxu0 0
      %1590 = vmatmul.mubr.bf16.gmra.mrb[0].mxu0 %v1358
      %v1591 = vpop.f32.mrb[0].mxu0
      %v1592 = vadd.f32 0.0, %v1591
      %v1593 = vpop.f32.mrb[0].mxu0
      %v1594 = vadd.f32 0.0, %v1593
      %v1595 = vpop.f32.mrb[0].mxu0
      %v1596 = vadd.f32 0.0, %v1595
      %v1597 = vpop.f32.mrb[0].mxu0
      %v1598 = vadd.f32 0.0, %v1597
      %1599 = vmatprep.mubr.bf16.mxu0 0
      %1600 = vmatmul.mubr.bf16.gmra.mrb[0].mxu0 %v1360
      %v1601 = vpop.f32.mrb[0].mxu0
      %v1602 = vadd.f32 0.0, %v1601
      %v1603 = vpop.f32.mrb[0].mxu0
      %v1604 = vadd.f32 0.0, %v1603
      %v1605 = vpop.f32.mrb[0].mxu0
      %v1606 = vadd.f32 0.0, %v1605
      %v1607 = vpop.f32.mrb[0].mxu0
      %v1608 = vadd.f32 0.0, %v1607
      %1609 = vdwg.mxu0
      %1610 = vmatprep.subr.bf16.mxu0 0
      %1611 = vmatpush1.bf16.msra.mxu0 %v1451
      %1612 = vmatprep.subr.bf16.mxu0 0
      %1613 = vmatpush1.bf16.msra.mxu0 %v1454
      %1614 = vmatprep.subr.bf16.mxu0 0
      %1615 = vmatpush1.bf16.msra.mxu0 %v1457
      %1616 = vmatprep.subr.bf16.mxu0 0
      %1617 = vmatpush1.bf16.msra.mxu0 %v1460
      %1618 = vmatprep.subr.bf16.mxu0 0
      %1619 = vmatpush1.bf16.msra.mxu0 %v1463
      %1620 = vmatprep.subr.bf16.mxu0 0
      %1621 = vmatpush1.bf16.msra.mxu0 %v1466
      %1622 = vmatprep.subr.bf16.mxu0 0
      %1623 = vmatpush1.bf16.msra.mxu0 %v1469
      %1624 = vmatprep.subr.bf16.mxu0 0
      %1625 = vmatpush1.bf16.msra.mxu0 %v1472
      %1626 = vmatprep.subr.bf16.mxu0 0
      %1627 = vmatpush1.bf16.msra.mxu0 0
      %1628 = vmatprep.subr.bf16.mxu0 0
      %1629 = vmatpush1.bf16.msra.mxu0 0
      %1630 = vmatprep.subr.bf16.mxu0 0
      %1631 = vmatpush1.bf16.msra.mxu0 0
      %1632 = vmatprep.subr.bf16.mxu0 0
      %1633 = vmatpush1.bf16.msra.mxu0 0
      %1634 = vmatprep.subr.bf16.mxu0 0
      %1635 = vmatpush1.bf16.msra.mxu0 0
      %1636 = vmatprep.subr.bf16.mxu0 0
      %1637 = vmatpush1.bf16.msra.mxu0 0
      %1638 = vmatprep.subr.bf16.mxu0 0
      %1639 = vmatpush1.bf16.msra.mxu0 0
      %1640 = vmatprep.subr.bf16.mxu0 0
      %1641 = vmatpush1.bf16.msra.mxu0 0
      %1642 = vmatprep.mubr.bf16.mxu0 0
      %1643 = vmatmul.mubr.bf16.gmra.mrb[0].mxu0 %v1346
      %v1644 = vpop.f32.mrb[0].mxu0
      %v1645 = vadd.f32 0.0, %v1644
      %v1646 = vpop.f32.mrb[0].mxu0
      %v1647 = vpop.f32.mrb[0].mxu0
      %v1648 = vadd.f32 0.0, %v1647
      %v1649 = vpop.f32.mrb[0].mxu0
      %1650 = vmatprep.mubr.bf16.mxu0 0
      %1651 = vmatmul.mubr.bf16.gmra.mrb[0].mxu0 %v1348
      %v1652 = vpop.f32.mrb[0].mxu0
      %v1653 = vadd.f32 0.0, %v1652
      %v1654 = vpop.f32.mrb[0].mxu0
      %v1655 = vpop.f32.mrb[0].mxu0
      %v1656 = vadd.f32 0.0, %v1655
      %v1657 = vpop.f32.mrb[0].mxu0
      %1658 = vmatprep.mubr.bf16.mxu0 0
      %1659 = vmatmul.mubr.bf16.gmra.mrb[0].mxu0 %v1350
      %v1660 = vpop.f32.mrb[0].mxu0
      %v1661 = vadd.f32 0.0, %v1660
      %v1662 = vpop.f32.mrb[0].mxu0
      %v1663 = vpop.f32.mrb[0].mxu0
      %v1664 = vadd.f32 0.0, %v1663
      %v1665 = vpop.f32.mrb[0].mxu0
      %1666 = vmatprep.mubr.bf16.mxu0 0
      %1667 = vmatmul.mubr.bf16.gmra.mrb[0].mxu0 %v1352
      %v1668 = vpop.f32.mrb[0].mxu0
      %v1669 = vadd.f32 0.0, %v1668
      %v1670 = vpop.f32.mrb[0].mxu0
      %v1671 = vpop.f32.mrb[0].mxu0
      %v1672 = vadd.f32 0.0, %v1671
      %v1673 = vpop.f32.mrb[0].mxu0
      %1674 = vmatprep.mubr.bf16.mxu0 0
      %1675 = vmatmul.mubr.bf16.gmra.mrb[0].mxu0 %v1354
      %v1676 = vpop.f32.mrb[0].mxu0
      %v1677 = vadd.f32 0.0, %v1676
      %v1678 = vpop.f32.mrb[0].mxu0
      %v1679 = vpop.f32.mrb[0].mxu0
      %v1680 = vadd.f32 0.0, %v1679
      %v1681 = vpop.f32.mrb[0].mxu0
      %1682 = vmatprep.mubr.bf16.mxu0 0
      %1683 = vmatmul.mubr.bf16.gmra.mrb[0].mxu0 %v1356
      %v1684 = vpop.f32.mrb[0].mxu0
      %v1685 = vadd.f32 0.0, %v1684
      %v1686 = vpop.f32.mrb[0].mxu0
      %v1687 = vpop.f32.mrb[0].mxu0
      %v1688 = vadd.f32 0.0, %v1687
      %v1689 = vpop.f32.mrb[0].mxu0
      %1690 = vmatprep.mubr.bf16.mxu0 0
      %1691 = vmatmul.mubr.bf16.gmra.mrb[0].mxu0 %v1358
      %v1692 = vpop.f32.mrb[0].mxu0
      %v1693 = vadd.f32 0.0, %v1692
      %v1694 = vpop.f32.mrb[0].mxu0
      %v1695 = vpop.f32.mrb[0].mxu0
      %v1696 = vadd.f32 0.0, %v1695
      %v1697 = vpop.f32.mrb[0].mxu0
      %1698 = vmatprep.mubr.bf16.mxu0 0
      %1699 = vmatmul.mubr.bf16.gmra.mrb[0].mxu0 %v1360
      %v1700 = vpop.f32.mrb[0].mxu0
      %v1701 = vadd.f32 0.0, %v1700
      %v1702 = vpop.f32.mrb[0].mxu0
      %v1703 = vpop.f32.mrb[0].mxu0
      %v1704 = vadd.f32 0.0, %v1703
      %v1705 = vpop.f32.mrb[0].mxu0
      %1706 = vdwg.mxu0
      %v1707 = vadd.f32 %v1126, %v1532
      %v1708 = vadd.f32 %v1128, %v1534
      %v1709 = vadd.f32 %v1239, %v1645
      %v1710 = vadd.f32 %v1130, %v1536
      %v1711 = vadd.f32 %v1132, %v1538
      %v1712 = vadd.f32 %v1242, %v1648
      %v1713 = vadd.f32 %v1136, %v1542
      %v1714 = vadd.f32 %v1138, %v1544
      %v1715 = vadd.f32 %v1247, %v1653
      %v1716 = vadd.f32 %v1140, %v1546
      %v1717 = vadd.f32 %v1142, %v1548
      %v1718 = vadd.f32 %v1250, %v1656
      %v1719 = vadd.f32 %v1146, %v1552
      %v1720 = vadd.f32 %v1148, %v1554
      %v1721 = vadd.f32 %v1255, %v1661
      %v1722 = vadd.f32 %v1150, %v1556
      %v1723 = vadd.f32 %v1152, %v1558
      %v1724 = vadd.f32 %v1258, %v1664
      %v1725 = vadd.f32 %v1156, %v1562
      %v1726 = vadd.f32 %v1158, %v1564
      %v1727 = vadd.f32 %v1263, %v1669
      %v1728 = vadd.f32 %v1160, %v1566
      %v1729 = vadd.f32 %v1162, %v1568
      %v1730 = vadd.f32 %v1266, %v1672
      %v1731 = vadd.f32 %v1166, %v1572
      %v1732 = vadd.f32 %v1168, %v1574
      %v1733 = vadd.f32 %v1271, %v1677
      %v1734 = vadd.f32 %v1170, %v1576
      %v1735 = vadd.f32 %v1172, %v1578
      %v1736 = vadd.f32 %v1274, %v1680
      %v1737 = vadd.f32 %v1176, %v1582
      %v1738 = vadd.f32 %v1178, %v1584
      %v1739 = vadd.f32 %v1279, %v1685
      %v1740 = vadd.f32 %v1180, %v1586
      %v1741 = vadd.f32 %v1182, %v1588
      %v1742 = vadd.f32 %v1282, %v1688
      %v1743 = vadd.f32 %v1186, %v1592
      %v1744 = vadd.f32 %v1188, %v1594
      %v1745 = vadd.f32 %v1287, %v1693
      %v1746 = vadd.f32 %v1190, %v1596
      %v1747 = vadd.f32 %v1192, %v1598
      %v1748 = vadd.f32 %v1290, %v1696
      %v1749 = vadd.f32 %v1196, %v1602
      %v1750 = vadd.f32 %v1198, %v1604
      %v1751 = vadd.f32 %v1295, %v1701
      %v1752 = vadd.f32 %v1200, %v1606
      %v1753 = vadd.f32 %v1202, %v1608
      %v1754 = vadd.f32 %v1298, %v1704
      %s1755 = scalar_lea.vmem %s2, 576
      %v1756 = vld [vmem:[%s1755] sm:$0xff]
      %v1757 = vld [vmem:[%s1755 + $0x8] sm:$0xf]
      %v1758 = vld [vmem:[%s1755 + $0xc] sm:$0xff]
      %v1759 = vld [vmem:[%s1755 + $0x14] sm:$0xf]
      %v1760 = vld [vmem:[%s1755 + $0x18] sm:$0xff]
      %v1761 = vld [vmem:[%s1755 + $0x20] sm:$0xf]
      %v1762 = vld [vmem:[%s1755 + $0x24] sm:$0xff]
      %v1763 = vld [vmem:[%s1755 + $0x2c] sm:$0xf]
      %v1764 = vld [vmem:[%s1755 + $0x30] sm:$0xff]
      %v1765 = vld [vmem:[%s1755 + $0x38] sm:$0xf]
      %v1766 = vld [vmem:[%s1755 + $0x3c] sm:$0xff]
      %v1767 = vld [vmem:[%s1755 + $0x44] sm:$0xf]
      %v1768 = vld [vmem:[%s1755 + $0x48] sm:$0xff]
      %v1769 = vld [vmem:[%s1755 + $0x50] sm:$0xf]
      %v1770 = vld [vmem:[%s1755 + $0x54] sm:$0xff]
      %v1771 = vld [vmem:[%s1755 + $0x5c] sm:$0xf]
      %v1772 = vld [vmem:[%s1755 + $0x60] sm:$0xff]
      %v1773 = vld [vmem:[%s1755 + $0x68] sm:$0xf]
      %v1774 = vld [vmem:[%s1755 + $0x6c] sm:$0xff]
      %v1775 = vld [vmem:[%s1755 + $0x74] sm:$0xf]
      %v1776 = vld [vmem:[%s1755 + $0x78] sm:$0xff]
      %v1777 = vld [vmem:[%s1755 + $0x80] sm:$0xf]
      %v1778 = vld [vmem:[%s1755 + $0x84] sm:$0xff]
      %v1779 = vld [vmem:[%s1755 + $0x8c] sm:$0xf]
      %v1780 = vld [vmem:[%s1755 + $0x90] sm:$0xff]
      %v1781 = vld [vmem:[%s1755 + $0x98] sm:$0xf]
      %v1782 = vld [vmem:[%s1755 + $0x9c] sm:$0xff]
      %v1783 = vld [vmem:[%s1755 + $0xa4] sm:$0xf]
      %v1784 = vld [vmem:[%s1755 + $0xa8] sm:$0xff]
      %v1785 = vld [vmem:[%s1755 + $0xb0] sm:$0xf]
      %v1786 = vld [vmem:[%s1755 + $0xb4] sm:$0xff]
      %v1787 = vld [vmem:[%s1755 + $0xbc] sm:$0xf]
      %vm1788 = vsmask.f32 6400
      %v1789 = vrot.slane %v550, 1
      %v1790 = vrot.slane %v552, 2
      %v1791 = vor.u32 %v1789, %v1790
      %v1792 = vrot.slane %v561, 1
      %v1793 = vrot.slane %v557, 2
      %v1794 = vor.u32 %v1792, %v1793
      %v1795 = vsel %vm1788, %v1791, %v1794
      %v1796 = vrot.slane %v569, 1
      %v1797 = vrot.slane %v565, 2
      %v1798 = vor.u32 %v1796, %v1797
      %v1799 = vsel %vm1788, %v1794, %v1798
      %v1800 = vrot.slane %v577, 1
      %v1801 = vrot.slane %v573, 2
      %v1802 = vor.u32 %v1800, %v1801
      %v1803 = vsel %vm1788, %v1798, %v1802
      %v1804 = vrot.slane %v585, 1
      %v1805 = vrot.slane %v581, 2
      %v1806 = vor.u32 %v1804, %v1805
      %v1807 = vsel %vm1788, %v1802, %v1806
      %v1808 = vrot.slane %v593, 1
      %v1809 = vrot.slane %v589, 2
      %v1810 = vor.u32 %v1808, %v1809
      %v1811 = vsel %vm1788, %v1806, %v1810
      %v1812 = vrot.slane %v601, 1
      %v1813 = vrot.slane %v597, 2
      %v1814 = vor.u32 %v1812, %v1813
      %v1815 = vsel %vm1788, %v1810, %v1814
      %v1816 = vrot.slane %v609, 1
      %v1817 = vrot.slane %v605, 2
      %v1818 = vor.u32 %v1816, %v1817
      %v1819 = vsel %vm1788, %v1814, %v1818
      %v1820 = vshrl.u32 %v514, 16
      %v1822 = vrot.slane %v1820, 1
      %v1823 = vrot.slane %v613, 2
      %v1824 = vor.u32 %v1822, %v1823
      %v1825 = vsel %vm1788, %v1818, %v1824
      %v1866 = vunpack.c.l.b16 %v1756
      %v1867 = vunpack.c.h.b16 %v1756
      %v1868 = vunpack.c.l.b16 %v1757
      %v1869 = vunpack.c.l.b16 %v1758
      %v1870 = vunpack.c.h.b16 %v1758
      %v1871 = vunpack.c.l.b16 %v1759
      %v1872 = vunpack.c.l.b16 %v1760
      %v1873 = vunpack.c.h.b16 %v1760
      %v1874 = vunpack.c.l.b16 %v1761
      %v1875 = vunpack.c.l.b16 %v1762
      %v1876 = vunpack.c.h.b16 %v1762
      %v1877 = vunpack.c.l.b16 %v1763
      %v1878 = vunpack.c.l.b16 %v1764
      %v1879 = vunpack.c.h.b16 %v1764
      %v1880 = vunpack.c.l.b16 %v1765
      %v1881 = vunpack.c.l.b16 %v1766
      %v1882 = vunpack.c.h.b16 %v1766
      %v1883 = vunpack.c.l.b16 %v1767
      %v1884 = vunpack.c.l.b16 %v1768
      %v1885 = vunpack.c.h.b16 %v1768
      %v1886 = vunpack.c.l.b16 %v1769
      %v1887 = vunpack.c.l.b16 %v1770
      %v1888 = vunpack.c.h.b16 %v1770
      %v1889 = vunpack.c.l.b16 %v1771
      %v1890 = vunpack.c.l.b16 %v1772
      %v1891 = vunpack.c.h.b16 %v1772
      %v1892 = vunpack.c.l.b16 %v1773
      %v1893 = vunpack.c.l.b16 %v1774
      %v1894 = vunpack.c.h.b16 %v1774
      %v1895 = vunpack.c.l.b16 %v1775
      %v1896 = vunpack.c.l.b16 %v1776
      %v1897 = vunpack.c.h.b16 %v1776
      %v1898 = vunpack.c.l.b16 %v1777
      %v1899 = vunpack.c.l.b16 %v1778
      %v1900 = vunpack.c.h.b16 %v1778
      %v1901 = vunpack.c.l.b16 %v1779
      %v1902 = vunpack.c.l.b16 %v1780
      %v1903 = vunpack.c.h.b16 %v1780
      %v1904 = vunpack.c.l.b16 %v1781
      %v1905 = vunpack.c.l.b16 %v1782
      %v1906 = vunpack.c.h.b16 %v1782
      %v1907 = vunpack.c.l.b16 %v1783
      %v1908 = vunpack.c.l.b16 %v1784
      %v1909 = vunpack.c.h.b16 %v1784
      %v1910 = vunpack.c.l.b16 %v1785
      %v1911 = vunpack.c.l.b16 %v1786
      %v1912 = vunpack.c.h.b16 %v1786
      %v1913 = vunpack.c.l.b16 %v1787
      %v1914 = vpack.c.b16 %v1869, %v1866
      %v1915 = vpack.c.b16 %v1870, %v1867
      %v1916 = vpack.c.b16 %v1871, %v1868
      %v1917 = vpack.c.b16 %v1875, %v1872
      %v1918 = vpack.c.b16 %v1876, %v1873
      %v1919 = vpack.c.b16 %v1877, %v1874
      %v1920 = vpack.c.b16 %v1881, %v1878
      %v1921 = vpack.c.b16 %v1882, %v1879
      %v1922 = vpack.c.b16 %v1883, %v1880
      %v1923 = vpack.c.b16 %v1887, %v1884
      %v1924 = vpack.c.b16 %v1888, %v1885
      %v1925 = vpack.c.b16 %v1889, %v1886
      %v1926 = vpack.c.b16 %v1893, %v1890
      %v1927 = vpack.c.b16 %v1894, %v1891
      %v1928 = vpack.c.b16 %v1895, %v1892
      %v1929 = vpack.c.b16 %v1899, %v1896
      %v1930 = vpack.c.b16 %v1900, %v1897
      %v1931 = vpack.c.b16 %v1901, %v1898
      %v1932 = vpack.c.b16 %v1905, %v1902
      %v1933 = vpack.c.b16 %v1906, %v1903
      %v1934 = vpack.c.b16 %v1907, %v1904
      %v1935 = vpack.c.b16 %v1911, %v1908
      %v1936 = vpack.c.b16 %v1912, %v1909
      %v1937 = vpack.c.b16 %v1913, %v1910
      %1962 = vmatprep.subr.bf16.mxu0 %v1915
      %1963 = vmatpush1.bf16.msra.mxu0 %v1914
      %1964 = vmatprep.subr.bf16.mxu0 %v1918
      %1965 = vmatpush1.bf16.msra.mxu0 %v1917
      %1966 = vmatprep.subr.bf16.mxu0 %v1921
      %1967 = vmatpush1.bf16.msra.mxu0 %v1920
      %1968 = vmatprep.subr.bf16.mxu0 %v1924
      %1969 = vmatpush1.bf16.msra.mxu0 %v1923
      %1970 = vmatprep.subr.bf16.mxu0 %v1927
      %1971 = vmatpush1.bf16.msra.mxu0 %v1926
      %1972 = vmatprep.subr.bf16.mxu0 %v1930
      %1973 = vmatpush1.bf16.msra.mxu0 %v1929
      %1974 = vmatprep.subr.bf16.mxu0 %v1933
      %1975 = vmatpush1.bf16.msra.mxu0 %v1932
      %1976 = vmatprep.subr.bf16.mxu0 %v1936
      %1977 = vmatpush1.bf16.msra.mxu0 %v1935
      %1978 = vmatprep.subr.bf16.mxu0 0
      %1979 = vmatpush1.bf16.msra.mxu0 0
      %1980 = vmatprep.subr.bf16.mxu0 0
      %1981 = vmatpush1.bf16.msra.mxu0 0
      %1982 = vmatprep.subr.bf16.mxu0 0
      %1983 = vmatpush1.bf16.msra.mxu0 0
      %1984 = vmatprep.subr.bf16.mxu0 0
      %1985 = vmatpush1.bf16.msra.mxu0 0
      %1986 = vmatprep.subr.bf16.mxu0 0
      %1987 = vmatpush1.bf16.msra.mxu0 0
      %1988 = vmatprep.subr.bf16.mxu0 0
      %1989 = vmatpush1.bf16.msra.mxu0 0
      %1990 = vmatprep.subr.bf16.mxu0 0
      %1991 = vmatpush1.bf16.msra.mxu0 0
      %1992 = vmatprep.subr.bf16.mxu0 0
      %1993 = vmatpush1.bf16.msra.mxu0 0
      %1994 = vmatprep.mubr.bf16.mxu0 0
      %1995 = vmatmul.mubr.bf16.gmra.mrb[0].mxu0 %v1795
      %v1996 = vpop.f32.mrb[0].mxu0
      %v1997 = vadd.f32 0.0, %v1996
      %v1998 = vpop.f32.mrb[0].mxu0
      %v1999 = vadd.f32 0.0, %v1998
      %v2000 = vpop.f32.mrb[0].mxu0
      %v2001 = vadd.f32 0.0, %v2000
      %v2002 = vpop.f32.mrb[0].mxu0
      %v2003 = vadd.f32 0.0, %v2002
      %2004 = vmatprep.mubr.bf16.mxu0 0
      %2005 = vmatmul.mubr.bf16.gmra.mrb[0].mxu0 %v1799
      %v2006 = vpop.f32.mrb[0].mxu0
      %v2007 = vadd.f32 0.0, %v2006
      %v2008 = vpop.f32.mrb[0].mxu0
      %v2009 = vadd.f32 0.0, %v2008
      %v2010 = vpop.f32.mrb[0].mxu0
      %v2011 = vadd.f32 0.0, %v2010
      %v2012 = vpop.f32.mrb[0].mxu0
      %v2013 = vadd.f32 0.0, %v2012
      %2014 = vmatprep.mubr.bf16.mxu0 0
      %2015 = vmatmul.mubr.bf16.gmra.mrb[0].mxu0 %v1803
      %v2016 = vpop.f32.mrb[0].mxu0
      %v2017 = vadd.f32 0.0, %v2016
      %v2018 = vpop.f32.mrb[0].mxu0
      %v2019 = vadd.f32 0.0, %v2018
      %v2020 = vpop.f32.mrb[0].mxu0
      %v2021 = vadd.f32 0.0, %v2020
      %v2022 = vpop.f32.mrb[0].mxu0
      %v2023 = vadd.f32 0.0, %v2022
      %2024 = vmatprep.mubr.bf16.mxu0 0
      %2025 = vmatmul.mubr.bf16.gmra.mrb[0].mxu0 %v1807
      %v2026 = vpop.f32.mrb[0].mxu0
      %v2027 = vadd.f32 0.0, %v2026
      %v2028 = vpop.f32.mrb[0].mxu0
      %v2029 = vadd.f32 0.0, %v2028
      %v2030 = vpop.f32.mrb[0].mxu0
      %v2031 = vadd.f32 0.0, %v2030
      %v2032 = vpop.f32.mrb[0].mxu0
      %v2033 = vadd.f32 0.0, %v2032
      %2034 = vmatprep.mubr.bf16.mxu0 0
      %2035 = vmatmul.mubr.bf16.gmra.mrb[0].mxu0 %v1811
      %v2036 = vpop.f32.mrb[0].mxu0
      %v2037 = vadd.f32 0.0, %v2036
      %v2038 = vpop.f32.mrb[0].mxu0
      %v2039 = vadd.f32 0.0, %v2038
      %v2040 = vpop.f32.mrb[0].mxu0
      %v2041 = vadd.f32 0.0, %v2040
      %v2042 = vpop.f32.mrb[0].mxu0
      %v2043 = vadd.f32 0.0, %v2042
      %2044 = vmatprep.mubr.bf16.mxu0 0
      %2045 = vmatmul.mubr.bf16.gmra.mrb[0].mxu0 %v1815
      %v2046 = vpop.f32.mrb[0].mxu0
      %v2047 = vadd.f32 0.0, %v2046
      %v2048 = vpop.f32.mrb[0].mxu0
      %v2049 = vadd.f32 0.0, %v2048
      %v2050 = vpop.f32.mrb[0].mxu0
      %v2051 = vadd.f32 0.0, %v2050
      %v2052 = vpop.f32.mrb[0].mxu0
      %v2053 = vadd.f32 0.0, %v2052
      %2054 = vmatprep.mubr.bf16.mxu0 0
      %2055 = vmatmul.mubr.bf16.gmra.mrb[0].mxu0 %v1819
      %v2056 = vpop.f32.mrb[0].mxu0
      %v2057 = vadd.f32 0.0, %v2056
      %v2058 = vpop.f32.mrb[0].mxu0
      %v2059 = vadd.f32 0.0, %v2058
      %v2060 = vpop.f32.mrb[0].mxu0
      %v2061 = vadd.f32 0.0, %v2060
      %v2062 = vpop.f32.mrb[0].mxu0
      %v2063 = vadd.f32 0.0, %v2062
      %2064 = vmatprep.mubr.bf16.mxu0 0
      %2065 = vmatmul.mubr.bf16.gmra.mrb[0].mxu0 %v1825
      %v2066 = vpop.f32.mrb[0].mxu0
      %v2067 = vadd.f32 0.0, %v2066
      %v2068 = vpop.f32.mrb[0].mxu0
      %v2069 = vadd.f32 0.0, %v2068
      %v2070 = vpop.f32.mrb[0].mxu0
      %v2071 = vadd.f32 0.0, %v2070
      %v2072 = vpop.f32.mrb[0].mxu0
      %v2073 = vadd.f32 0.0, %v2072
      %2074 = vdwg.mxu0
      %2075 = vmatprep.subr.bf16.mxu0 0
      %2076 = vmatpush1.bf16.msra.mxu0 %v1916
      %2077 = vmatprep.subr.bf16.mxu0 0
      %2078 = vmatpush1.bf16.msra.mxu0 %v1919
      %2079 = vmatprep.subr.bf16.mxu0 0
      %2080 = vmatpush1.bf16.msra.mxu0 %v1922
      %2081 = vmatprep.subr.bf16.mxu0 0
      %2082 = vmatpush1.bf16.msra.mxu0 %v1925
      %2083 = vmatprep.subr.bf16.mxu0 0
      %2084 = vmatpush1.bf16.msra.mxu0 %v1928
      %2085 = vmatprep.subr.bf16.mxu0 0
      %2086 = vmatpush1.bf16.msra.mxu0 %v1931
      %2087 = vmatprep.subr.bf16.mxu0 0
      %2088 = vmatpush1.bf16.msra.mxu0 %v1934
      %2089 = vmatprep.subr.bf16.mxu0 0
      %2090 = vmatpush1.bf16.msra.mxu0 %v1937
      %2091 = vmatprep.subr.bf16.mxu0 0
      %2092 = vmatpush1.bf16.msra.mxu0 0
      %2093 = vmatprep.subr.bf16.mxu0 0
      %2094 = vmatpush1.bf16.msra.mxu0 0
      %2095 = vmatprep.subr.bf16.mxu0 0
      %2096 = vmatpush1.bf16.msra.mxu0 0
      %2097 = vmatprep.subr.bf16.mxu0 0
      %2098 = vmatpush1.bf16.msra.mxu0 0
      %2099 = vmatprep.subr.bf16.mxu0 0
      %2100 = vmatpush1.bf16.msra.mxu0 0
      %2101 = vmatprep.subr.bf16.mxu0 0
      %2102 = vmatpush1.bf16.msra.mxu0 0
      %2103 = vmatprep.subr.bf16.mxu0 0
      %2104 = vmatpush1.bf16.msra.mxu0 0
      %2105 = vmatprep.subr.bf16.mxu0 0
      %2106 = vmatpush1.bf16.msra.mxu0 0
      %2107 = vmatprep.mubr.bf16.mxu0 0
      %2108 = vmatmul.mubr.bf16.gmra.mrb[0].mxu0 %v1795
      %v2109 = vpop.f32.mrb[0].mxu0
      %v2110 = vadd.f32 0.0, %v2109
      %v2111 = vpop.f32.mrb[0].mxu0
      %v2112 = vpop.f32.mrb[0].mxu0
      %v2113 = vadd.f32 0.0, %v2112
      %v2114 = vpop.f32.mrb[0].mxu0
      %2115 = vmatprep.mubr.bf16.mxu0 0
      %2116 = vmatmul.mubr.bf16.gmra.mrb[0].mxu0 %v1799
      %v2117 = vpop.f32.mrb[0].mxu0
      %v2118 = vadd.f32 0.0, %v2117
      %v2119 = vpop.f32.mrb[0].mxu0
      %v2120 = vpop.f32.mrb[0].mxu0
      %v2121 = vadd.f32 0.0, %v2120
      %v2122 = vpop.f32.mrb[0].mxu0
      %2123 = vmatprep.mubr.bf16.mxu0 0
      %2124 = vmatmul.mubr.bf16.gmra.mrb[0].mxu0 %v1803
      %v2125 = vpop.f32.mrb[0].mxu0
      %v2126 = vadd.f32 0.0, %v2125
      %v2127 = vpop.f32.mrb[0].mxu0
      %v2128 = vpop.f32.mrb[0].mxu0
      %v2129 = vadd.f32 0.0, %v2128
      %v2130 = vpop.f32.mrb[0].mxu0
      %2131 = vmatprep.mubr.bf16.mxu0 0
      %2132 = vmatmul.mubr.bf16.gmra.mrb[0].mxu0 %v1807
      %v2133 = vpop.f32.mrb[0].mxu0
      %v2134 = vadd.f32 0.0, %v2133
      %v2135 = vpop.f32.mrb[0].mxu0
      %v2136 = vpop.f32.mrb[0].mxu0
      %v2137 = vadd.f32 0.0, %v2136
      %v2138 = vpop.f32.mrb[0].mxu0
      %2139 = vmatprep.mubr.bf16.mxu0 0
      %2140 = vmatmul.mubr.bf16.gmra.mrb[0].mxu0 %v1811
      %v2141 = vpop.f32.mrb[0].mxu0
      %v2142 = vadd.f32 0.0, %v2141
      %v2143 = vpop.f32.mrb[0].mxu0
      %v2144 = vpop.f32.mrb[0].mxu0
      %v2145 = vadd.f32 0.0, %v2144
      %v2146 = vpop.f32.mrb[0].mxu0
      %2147 = vmatprep.mubr.bf16.mxu0 0
      %2148 = vmatmul.mubr.bf16.gmra.mrb[0].mxu0 %v1815
      %v2149 = vpop.f32.mrb[0].mxu0
      %v2150 = vadd.f32 0.0, %v2149
      %v2151 = vpop.f32.mrb[0].mxu0
      %v2152 = vpop.f32.mrb[0].mxu0
      %v2153 = vadd.f32 0.0, %v2152
      %v2154 = vpop.f32.mrb[0].mxu0
      %2155 = vmatprep.mubr.bf16.mxu0 0
      %2156 = vmatmul.mubr.bf16.gmra.mrb[0].mxu0 %v1819
      %v2157 = vpop.f32.mrb[0].mxu0
      %v2158 = vadd.f32 0.0, %v2157
      %v2159 = vpop.f32.mrb[0].mxu0
      %v2160 = vpop.f32.mrb[0].mxu0
      %v2161 = vadd.f32 0.0, %v2160
      %v2162 = vpop.f32.mrb[0].mxu0
      %2163 = vmatprep.mubr.bf16.mxu0 0
      %2164 = vmatmul.mubr.bf16.gmra.mrb[0].mxu0 %v1825
      %v2165 = vpop.f32.mrb[0].mxu0
      %v2166 = vadd.f32 0.0, %v2165
      %v2167 = vpop.f32.mrb[0].mxu0
      %v2168 = vpop.f32.mrb[0].mxu0
      %v2169 = vadd.f32 0.0, %v2168
      %v2170 = vpop.f32.mrb[0].mxu0
      %2171 = vdwg.mxu0
      %v2172 = vadd.f32 %v1707, %v1997
      %v2173 = vadd.f32 %v1708, %v1999
      %v2174 = vadd.f32 %v1709, %v2110
      %v2175 = vadd.f32 %v1710, %v2001
      %v2176 = vadd.f32 %v1711, %v2003
      %v2177 = vadd.f32 %v1712, %v2113
      %v2178 = vadd.f32 %v1713, %v2007
      %v2179 = vadd.f32 %v1714, %v2009
      %v2180 = vadd.f32 %v1715, %v2118
      %v2181 = vadd.f32 %v1716, %v2011
      %v2182 = vadd.f32 %v1717, %v2013
      %v2183 = vadd.f32 %v1718, %v2121
      %v2184 = vadd.f32 %v1719, %v2017
      %v2185 = vadd.f32 %v1720, %v2019
      %v2186 = vadd.f32 %v1721, %v2126
      %v2187 = vadd.f32 %v1722, %v2021
      %v2188 = vadd.f32 %v1723, %v2023
      %v2189 = vadd.f32 %v1724, %v2129
      %v2190 = vadd.f32 %v1725, %v2027
      %v2191 = vadd.f32 %v1726, %v2029
      %v2192 = vadd.f32 %v1727, %v2134
      %v2193 = vadd.f32 %v1728, %v2031
      %v2194 = vadd.f32 %v1729, %v2033
      %v2195 = vadd.f32 %v1730, %v2137
      %v2196 = vadd.f32 %v1731, %v2037
      %v2197 = vadd.f32 %v1732, %v2039
      %v2198 = vadd.f32 %v1733, %v2142
      %v2199 = vadd.f32 %v1734, %v2041
      %v2200 = vadd.f32 %v1735, %v2043
      %v2201 = vadd.f32 %v1736, %v2145
      %v2202 = vadd.f32 %v1737, %v2047
      %v2203 = vadd.f32 %v1738, %v2049
      %v2204 = vadd.f32 %v1739, %v2150
      %v2205 = vadd.f32 %v1740, %v2051
      %v2206 = vadd.f32 %v1741, %v2053
      %v2207 = vadd.f32 %v1742, %v2153
      %v2208 = vadd.f32 %v1743, %v2057
      %v2209 = vadd.f32 %v1744, %v2059
      %v2210 = vadd.f32 %v1745, %v2158
      %v2211 = vadd.f32 %v1746, %v2061
      %v2212 = vadd.f32 %v1747, %v2063
      %v2213 = vadd.f32 %v1748, %v2161
      %v2214 = vadd.f32 %v1749, %v2067
      %v2215 = vadd.f32 %v1750, %v2069
      %v2216 = vadd.f32 %v1751, %v2166
      %v2217 = vadd.f32 %v1752, %v2071
      %v2218 = vadd.f32 %v1753, %v2073
      %v2219 = vadd.f32 %v1754, %v2169
      %s2220 = scalar_lea.vmem %s2, 768
      %v2221 = vld [vmem:[%s2220] sm:$0xff]
      %v2222 = vld [vmem:[%s2220 + $0x8] sm:$0xf]
      %v2223 = vld [vmem:[%s2220 + $0xc] sm:$0xff]
      %v2224 = vld [vmem:[%s2220 + $0x14] sm:$0xf]
      %v2225 = vld [vmem:[%s2220 + $0x18] sm:$0xff]
      %v2226 = vld [vmem:[%s2220 + $0x20] sm:$0xf]
      %v2227 = vld [vmem:[%s2220 + $0x24] sm:$0xff]
      %v2228 = vld [vmem:[%s2220 + $0x2c] sm:$0xf]
      %v2229 = vld [vmem:[%s2220 + $0x30] sm:$0xff]
      %v2230 = vld [vmem:[%s2220 + $0x38] sm:$0xf]
      %v2231 = vld [vmem:[%s2220 + $0x3c] sm:$0xff]
      %v2232 = vld [vmem:[%s2220 + $0x44] sm:$0xf]
      %v2233 = vld [vmem:[%s2220 + $0x48] sm:$0xff]
      %v2234 = vld [vmem:[%s2220 + $0x50] sm:$0xf]
      %v2235 = vld [vmem:[%s2220 + $0x54] sm:$0xff]
      %v2236 = vld [vmem:[%s2220 + $0x5c] sm:$0xf]
      %v2237 = vld [vmem:[%s2220 + $0x60] sm:$0xff]
      %v2238 = vld [vmem:[%s2220 + $0x68] sm:$0xf]
      %v2239 = vld [vmem:[%s2220 + $0x6c] sm:$0xff]
      %v2240 = vld [vmem:[%s2220 + $0x74] sm:$0xf]
      %v2241 = vld [vmem:[%s2220 + $0x78] sm:$0xff]
      %v2242 = vld [vmem:[%s2220 + $0x80] sm:$0xf]
      %v2243 = vld [vmem:[%s2220 + $0x84] sm:$0xff]
      %v2244 = vld [vmem:[%s2220 + $0x8c] sm:$0xf]
      %v2245 = vld [vmem:[%s2220 + $0x90] sm:$0xff]
      %v2246 = vld [vmem:[%s2220 + $0x98] sm:$0xf]
      %v2247 = vld [vmem:[%s2220 + $0x9c] sm:$0xff]
      %v2248 = vld [vmem:[%s2220 + $0xa4] sm:$0xf]
      %v2249 = vld [vmem:[%s2220 + $0xa8] sm:$0xff]
      %v2250 = vld [vmem:[%s2220 + $0xb0] sm:$0xf]
      %v2251 = vld [vmem:[%s2220 + $0xb4] sm:$0xff]
      %v2252 = vld [vmem:[%s2220 + $0xbc] sm:$0xf]
      %vm2253 = vcmask 1045504
      %v2254 = vrot.slane %v474, 2
      %v2255 = vrot.slane %v475, 2
      %v2256 = vsel %vm2253, %v2254, %v2255
      %v2257 = vrot.slane %v476, 2
      %v2258 = vsel %vm2253, %v2255, %v2257
      %v2259 = vrot.slane %v477, 2
      %v2260 = vsel %vm2253, %v2257, %v2259
      %v2261 = vrot.slane %v478, 2
      %v2262 = vsel %vm2253, %v2259, %v2261
      %v2263 = vrot.slane %v479, 2
      %v2264 = vsel %vm2253, %v2261, %v2263
      %v2265 = vrot.slane %v480, 2
      %v2266 = vsel %vm2253, %v2263, %v2265
      %v2267 = vrot.slane %v481, 2
      %v2268 = vsel %vm2253, %v2265, %v2267
      %v2269 = vrot.slane %v514, 2
      %v2270 = vsel %vm2253, %v2267, %v2269
      %v2311 = vunpack.c.l.b16 %v2221
      %v2312 = vunpack.c.h.b16 %v2221
      %v2313 = vunpack.c.l.b16 %v2222
      %v2314 = vunpack.c.l.b16 %v2223
      %v2315 = vunpack.c.h.b16 %v2223
      %v2316 = vunpack.c.l.b16 %v2224
      %v2317 = vunpack.c.l.b16 %v2225
      %v2318 = vunpack.c.h.b16 %v2225
      %v2319 = vunpack.c.l.b16 %v2226
      %v2320 = vunpack.c.l.b16 %v2227
      %v2321 = vunpack.c.h.b16 %v2227
      %v2322 = vunpack.c.l.b16 %v2228
      %v2323 = vunpack.c.l.b16 %v2229
      %v2324 = vunpack.c.h.b16 %v2229
      %v2325 = vunpack.c.l.b16 %v2230
      %v2326 = vunpack.c.l.b16 %v2231
      %v2327 = vunpack.c.h.b16 %v2231
      %v2328 = vunpack.c.l.b16 %v2232
      %v2329 = vunpack.c.l.b16 %v2233
      %v2330 = vunpack.c.h.b16 %v2233
      %v2331 = vunpack.c.l.b16 %v2234
      %v2332 = vunpack.c.l.b16 %v2235
      %v2333 = vunpack.c.h.b16 %v2235
      %v2334 = vunpack.c.l.b16 %v2236
      %v2335 = vunpack.c.l.b16 %v2237
      %v2336 = vunpack.c.h.b16 %v2237
      %v2337 = vunpack.c.l.b16 %v2238
      %v2338 = vunpack.c.l.b16 %v2239
      %v2339 = vunpack.c.h.b16 %v2239
      %v2340 = vunpack.c.l.b16 %v2240
      %v2341 = vunpack.c.l.b16 %v2241
      %v2342 = vunpack.c.h.b16 %v2241
      %v2343 = vunpack.c.l.b16 %v2242
      %v2344 = vunpack.c.l.b16 %v2243
      %v2345 = vunpack.c.h.b16 %v2243
      %v2346 = vunpack.c.l.b16 %v2244
      %v2347 = vunpack.c.l.b16 %v2245
      %v2348 = vunpack.c.h.b16 %v2245
      %v2349 = vunpack.c.l.b16 %v2246
      %v2350 = vunpack.c.l.b16 %v2247
      %v2351 = vunpack.c.h.b16 %v2247
      %v2352 = vunpack.c.l.b16 %v2248
      %v2353 = vunpack.c.l.b16 %v2249
      %v2354 = vunpack.c.h.b16 %v2249
      %v2355 = vunpack.c.l.b16 %v2250
      %v2356 = vunpack.c.l.b16 %v2251
      %v2357 = vunpack.c.h.b16 %v2251
      %v2358 = vunpack.c.l.b16 %v2252
      %v2359 = vpack.c.b16 %v2314, %v2311
      %v2360 = vpack.c.b16 %v2315, %v2312
      %v2361 = vpack.c.b16 %v2316, %v2313
      %v2362 = vpack.c.b16 %v2320, %v2317
      %v2363 = vpack.c.b16 %v2321, %v2318
      %v2364 = vpack.c.b16 %v2322, %v2319
      %v2365 = vpack.c.b16 %v2326, %v2323
      %v2366 = vpack.c.b16 %v2327, %v2324
      %v2367 = vpack.c.b16 %v2328, %v2325
      %v2368 = vpack.c.b16 %v2332, %v2329
      %v2369 = vpack.c.b16 %v2333, %v2330
      %v2370 = vpack.c.b16 %v2334, %v2331
      %v2371 = vpack.c.b16 %v2338, %v2335
      %v2372 = vpack.c.b16 %v2339, %v2336
      %v2373 = vpack.c.b16 %v2340, %v2337
      %v2374 = vpack.c.b16 %v2344, %v2341
      %v2375 = vpack.c.b16 %v2345, %v2342
      %v2376 = vpack.c.b16 %v2346, %v2343
      %v2377 = vpack.c.b16 %v2350, %v2347
      %v2378 = vpack.c.b16 %v2351, %v2348
      %v2379 = vpack.c.b16 %v2352, %v2349
      %v2380 = vpack.c.b16 %v2356, %v2353
      %v2381 = vpack.c.b16 %v2357, %v2354
      %v2382 = vpack.c.b16 %v2358, %v2355
      %2407 = vmatprep.subr.bf16.mxu0 %v2360
      %2408 = vmatpush1.bf16.msra.mxu0 %v2359
      %2409 = vmatprep.subr.bf16.mxu0 %v2363
      %2410 = vmatpush1.bf16.msra.mxu0 %v2362
      %2411 = vmatprep.subr.bf16.mxu0 %v2366
      %2412 = vmatpush1.bf16.msra.mxu0 %v2365
      %2413 = vmatprep.subr.bf16.mxu0 %v2369
      %2414 = vmatpush1.bf16.msra.mxu0 %v2368
      %2415 = vmatprep.subr.bf16.mxu0 %v2372
      %2416 = vmatpush1.bf16.msra.mxu0 %v2371
      %2417 = vmatprep.subr.bf16.mxu0 %v2375
      %2418 = vmatpush1.bf16.msra.mxu0 %v2374
      %2419 = vmatprep.subr.bf16.mxu0 %v2378
      %2420 = vmatpush1.bf16.msra.mxu0 %v2377
      %2421 = vmatprep.subr.bf16.mxu0 %v2381
      %2422 = vmatpush1.bf16.msra.mxu0 %v2380
      %2423 = vmatprep.subr.bf16.mxu0 0
      %2424 = vmatpush1.bf16.msra.mxu0 0
      %2425 = vmatprep.subr.bf16.mxu0 0
      %2426 = vmatpush1.bf16.msra.mxu0 0
      %2427 = vmatprep.subr.bf16.mxu0 0
      %2428 = vmatpush1.bf16.msra.mxu0 0
      %2429 = vmatprep.subr.bf16.mxu0 0
      %2430 = vmatpush1.bf16.msra.mxu0 0
      %2431 = vmatprep.subr.bf16.mxu0 0
      %2432 = vmatpush1.bf16.msra.mxu0 0
      %2433 = vmatprep.subr.bf16.mxu0 0
      %2434 = vmatpush1.bf16.msra.mxu0 0
      %2435 = vmatprep.subr.bf16.mxu0 0
      %2436 = vmatpush1.bf16.msra.mxu0 0
      %2437 = vmatprep.subr.bf16.mxu0 0
      %2438 = vmatpush1.bf16.msra.mxu0 0
      %2439 = vmatprep.mubr.bf16.mxu0 0
      %2440 = vmatmul.mubr.bf16.gmra.mrb[0].mxu0 %v2256
      %v2441 = vpop.f32.mrb[0].mxu0
      %v2442 = vadd.f32 0.0, %v2441
      %v2443 = vpop.f32.mrb[0].mxu0
      %v2444 = vadd.f32 0.0, %v2443
      %v2445 = vpop.f32.mrb[0].mxu0
      %v2446 = vadd.f32 0.0, %v2445
      %v2447 = vpop.f32.mrb[0].mxu0
      %v2448 = vadd.f32 0.0, %v2447
      %2449 = vmatprep.mubr.bf16.mxu0 0
      %2450 = vmatmul.mubr.bf16.gmra.mrb[0].mxu0 %v2258
      %v2451 = vpop.f32.mrb[0].mxu0
      %v2452 = vadd.f32 0.0, %v2451
      %v2453 = vpop.f32.mrb[0].mxu0
      %v2454 = vadd.f32 0.0, %v2453
      %v2455 = vpop.f32.mrb[0].mxu0
      %v2456 = vadd.f32 0.0, %v2455
      %v2457 = vpop.f32.mrb[0].mxu0
      %v2458 = vadd.f32 0.0, %v2457
      %2459 = vmatprep.mubr.bf16.mxu0 0
      %2460 = vmatmul.mubr.bf16.gmra.mrb[0].mxu0 %v2260
      %v2461 = vpop.f32.mrb[0].mxu0
      %v2462 = vadd.f32 0.0, %v2461
      %v2463 = vpop.f32.mrb[0].mxu0
      %v2464 = vadd.f32 0.0, %v2463
      %v2465 = vpop.f32.mrb[0].mxu0
      %v2466 = vadd.f32 0.0, %v2465
      %v2467 = vpop.f32.mrb[0].mxu0
      %v2468 = vadd.f32 0.0, %v2467
      %2469 = vmatprep.mubr.bf16.mxu0 0
      %2470 = vmatmul.mubr.bf16.gmra.mrb[0].mxu0 %v2262
      %v2471 = vpop.f32.mrb[0].mxu0
      %v2472 = vadd.f32 0.0, %v2471
      %v2473 = vpop.f32.mrb[0].mxu0
      %v2474 = vadd.f32 0.0, %v2473
      %v2475 = vpop.f32.mrb[0].mxu0
      %v2476 = vadd.f32 0.0, %v2475
      %v2477 = vpop.f32.mrb[0].mxu0
      %v2478 = vadd.f32 0.0, %v2477
      %2479 = vmatprep.mubr.bf16.mxu0 0
      %2480 = vmatmul.mubr.bf16.gmra.mrb[0].mxu0 %v2264
      %v2481 = vpop.f32.mrb[0].mxu0
      %v2482 = vadd.f32 0.0, %v2481
      %v2483 = vpop.f32.mrb[0].mxu0
      %v2484 = vadd.f32 0.0, %v2483
      %v2485 = vpop.f32.mrb[0].mxu0
      %v2486 = vadd.f32 0.0, %v2485
      %v2487 = vpop.f32.mrb[0].mxu0
      %v2488 = vadd.f32 0.0, %v2487
      %2489 = vmatprep.mubr.bf16.mxu0 0
      %2490 = vmatmul.mubr.bf16.gmra.mrb[0].mxu0 %v2266
      %v2491 = vpop.f32.mrb[0].mxu0
      %v2492 = vadd.f32 0.0, %v2491
      %v2493 = vpop.f32.mrb[0].mxu0
      %v2494 = vadd.f32 0.0, %v2493
      %v2495 = vpop.f32.mrb[0].mxu0
      %v2496 = vadd.f32 0.0, %v2495
      %v2497 = vpop.f32.mrb[0].mxu0
      %v2498 = vadd.f32 0.0, %v2497
      %2499 = vmatprep.mubr.bf16.mxu0 0
      %2500 = vmatmul.mubr.bf16.gmra.mrb[0].mxu0 %v2268
      %v2501 = vpop.f32.mrb[0].mxu0
      %v2502 = vadd.f32 0.0, %v2501
      %v2503 = vpop.f32.mrb[0].mxu0
      %v2504 = vadd.f32 0.0, %v2503
      %v2505 = vpop.f32.mrb[0].mxu0
      %v2506 = vadd.f32 0.0, %v2505
      %v2507 = vpop.f32.mrb[0].mxu0
      %v2508 = vadd.f32 0.0, %v2507
      %2509 = vmatprep.mubr.bf16.mxu0 0
      %2510 = vmatmul.mubr.bf16.gmra.mrb[0].mxu0 %v2270
      %v2511 = vpop.f32.mrb[0].mxu0
      %v2512 = vadd.f32 0.0, %v2511
      %v2513 = vpop.f32.mrb[0].mxu0
      %v2514 = vadd.f32 0.0, %v2513
      %v2515 = vpop.f32.mrb[0].mxu0
      %v2516 = vadd.f32 0.0, %v2515
      %v2517 = vpop.f32.mrb[0].mxu0
      %v2518 = vadd.f32 0.0, %v2517
      %2519 = vdwg.mxu0
      %2520 = vmatprep.subr.bf16.mxu0 0
      %2521 = vmatpush1.bf16.msra.mxu0 %v2361
      %2522 = vmatprep.subr.bf16.mxu0 0
      %2523 = vmatpush1.bf16.msra.mxu0 %v2364
      %2524 = vmatprep.subr.bf16.mxu0 0
      %2525 = vmatpush1.bf16.msra.mxu0 %v2367
      %2526 = vmatprep.subr.bf16.mxu0 0
      %2527 = vmatpush1.bf16.msra.mxu0 %v2370
      %2528 = vmatprep.subr.bf16.mxu0 0
      %2529 = vmatpush1.bf16.msra.mxu0 %v2373
      %2530 = vmatprep.subr.bf16.mxu0 0
      %2531 = vmatpush1.bf16.msra.mxu0 %v2376
      %2532 = vmatprep.subr.bf16.mxu0 0
      %2533 = vmatpush1.bf16.msra.mxu0 %v2379
      %2534 = vmatprep.subr.bf16.mxu0 0
      %2535 = vmatpush1.bf16.msra.mxu0 %v2382
      %2536 = vmatprep.subr.bf16.mxu0 0
      %2537 = vmatpush1.bf16.msra.mxu0 0
      %2538 = vmatprep.subr.bf16.mxu0 0
      %2539 = vmatpush1.bf16.msra.mxu0 0
      %2540 = vmatprep.subr.bf16.mxu0 0
      %2541 = vmatpush1.bf16.msra.mxu0 0
      %2542 = vmatprep.subr.bf16.mxu0 0
      %2543 = vmatpush1.bf16.msra.mxu0 0
      %2544 = vmatprep.subr.bf16.mxu0 0
      %2545 = vmatpush1.bf16.msra.mxu0 0
      %2546 = vmatprep.subr.bf16.mxu0 0
      %2547 = vmatpush1.bf16.msra.mxu0 0
      %2548 = vmatprep.subr.bf16.mxu0 0
      %2549 = vmatpush1.bf16.msra.mxu0 0
      %2550 = vmatprep.subr.bf16.mxu0 0
      %2551 = vmatpush1.bf16.msra.mxu0 0
      %2552 = vmatprep.mubr.bf16.mxu0 0
      %2553 = vmatmul.mubr.bf16.gmra.mrb[0].mxu0 %v2256
      %v2554 = vpop.f32.mrb[0].mxu0
      %v2555 = vadd.f32 0.0, %v2554
      %v2556 = vpop.f32.mrb[0].mxu0
      %v2557 = vpop.f32.mrb[0].mxu0
      %v2558 = vadd.f32 0.0, %v2557
      %v2559 = vpop.f32.mrb[0].mxu0
      %2560 = vmatprep.mubr.bf16.mxu0 0
      %2561 = vmatmul.mubr.bf16.gmra.mrb[0].mxu0 %v2258
      %v2562 = vpop.f32.mrb[0].mxu0
      %v2563 = vadd.f32 0.0, %v2562
      %v2564 = vpop.f32.mrb[0].mxu0
      %v2565 = vpop.f32.mrb[0].mxu0
      %v2566 = vadd.f32 0.0, %v2565
      %v2567 = vpop.f32.mrb[0].mxu0
      %2568 = vmatprep.mubr.bf16.mxu0 0
      %2569 = vmatmul.mubr.bf16.gmra.mrb[0].mxu0 %v2260
      %v2570 = vpop.f32.mrb[0].mxu0
      %v2571 = vadd.f32 0.0, %v2570
      %v2572 = vpop.f32.mrb[0].mxu0
      %v2573 = vpop.f32.mrb[0].mxu0
      %v2574 = vadd.f32 0.0, %v2573
      %v2575 = vpop.f32.mrb[0].mxu0
      %2576 = vmatprep.mubr.bf16.mxu0 0
      %2577 = vmatmul.mubr.bf16.gmra.mrb[0].mxu0 %v2262
      %v2578 = vpop.f32.mrb[0].mxu0
      %v2579 = vadd.f32 0.0, %v2578
      %v2580 = vpop.f32.mrb[0].mxu0
      %v2581 = vpop.f32.mrb[0].mxu0
      %v2582 = vadd.f32 0.0, %v2581
      %v2583 = vpop.f32.mrb[0].mxu0
      %2584 = vmatprep.mubr.bf16.mxu0 0
      %2585 = vmatmul.mubr.bf16.gmra.mrb[0].mxu0 %v2264
      %v2586 = vpop.f32.mrb[0].mxu0
      %v2587 = vadd.f32 0.0, %v2586
      %v2588 = vpop.f32.mrb[0].mxu0
      %v2589 = vpop.f32.mrb[0].mxu0
      %v2590 = vadd.f32 0.0, %v2589
      %v2591 = vpop.f32.mrb[0].mxu0
      %2592 = vmatprep.mubr.bf16.mxu0 0
      %2593 = vmatmul.mubr.bf16.gmra.mrb[0].mxu0 %v2266
      %v2594 = vpop.f32.mrb[0].mxu0
      %v2595 = vadd.f32 0.0, %v2594
      %v2596 = vpop.f32.mrb[0].mxu0
      %v2597 = vpop.f32.mrb[0].mxu0
      %v2598 = vadd.f32 0.0, %v2597
      %v2599 = vpop.f32.mrb[0].mxu0
      %2600 = vmatprep.mubr.bf16.mxu0 0
      %2601 = vmatmul.mubr.bf16.gmra.mrb[0].mxu0 %v2268
      %v2602 = vpop.f32.mrb[0].mxu0
      %v2603 = vadd.f32 0.0, %v2602
      %v2604 = vpop.f32.mrb[0].mxu0
      %v2605 = vpop.f32.mrb[0].mxu0
      %v2606 = vadd.f32 0.0, %v2605
      %v2607 = vpop.f32.mrb[0].mxu0
      %2608 = vmatprep.mubr.bf16.mxu0 0
      %2609 = vmatmul.mubr.bf16.gmra.mrb[0].mxu0 %v2270
      %v2610 = vpop.f32.mrb[0].mxu0
      %v2611 = vadd.f32 0.0, %v2610
      %v2612 = vpop.f32.mrb[0].mxu0
      %v2613 = vpop.f32.mrb[0].mxu0
      %v2614 = vadd.f32 0.0, %v2613
      %v2615 = vpop.f32.mrb[0].mxu0
      %2616 = vdwg.mxu0
      %v2617 = vadd.f32 %v2172, %v2442
      %v2618 = vadd.f32 %v2173, %v2444
      %v2619 = vadd.f32 %v2174, %v2555
      %v2620 = vadd.f32 %v2175, %v2446
      %v2621 = vadd.f32 %v2176, %v2448
      %v2622 = vadd.f32 %v2177, %v2558
      %v2623 = vadd.f32 %v2178, %v2452
      %v2624 = vadd.f32 %v2179, %v2454
      %v2625 = vadd.f32 %v2180, %v2563
      %v2626 = vadd.f32 %v2181, %v2456
      %v2627 = vadd.f32 %v2182, %v2458
      %v2628 = vadd.f32 %v2183, %v2566
      %v2629 = vadd.f32 %v2184, %v2462
      %v2630 = vadd.f32 %v2185, %v2464
      %v2631 = vadd.f32 %v2186, %v2571
      %v2632 = vadd.f32 %v2187, %v2466
      %v2633 = vadd.f32 %v2188, %v2468
      %v2634 = vadd.f32 %v2189, %v2574
      %v2635 = vadd.f32 %v2190, %v2472
      %v2636 = vadd.f32 %v2191, %v2474
      %v2637 = vadd.f32 %v2192, %v2579
      %v2638 = vadd.f32 %v2193, %v2476
      %v2639 = vadd.f32 %v2194, %v2478
      %v2640 = vadd.f32 %v2195, %v2582
      %v2641 = vadd.f32 %v2196, %v2482
      %v2642 = vadd.f32 %v2197, %v2484
      %v2643 = vadd.f32 %v2198, %v2587
      %v2644 = vadd.f32 %v2199, %v2486
      %v2645 = vadd.f32 %v2200, %v2488
      %v2646 = vadd.f32 %v2201, %v2590
      %v2647 = vadd.f32 %v2202, %v2492
      %v2648 = vadd.f32 %v2203, %v2494
      %v2649 = vadd.f32 %v2204, %v2595
      %v2650 = vadd.f32 %v2205, %v2496
      %v2651 = vadd.f32 %v2206, %v2498
      %v2652 = vadd.f32 %v2207, %v2598
      %v2653 = vadd.f32 %v2208, %v2502
      %v2654 = vadd.f32 %v2209, %v2504
      %v2655 = vadd.f32 %v2210, %v2603
      %v2656 = vadd.f32 %v2211, %v2506
      %v2657 = vadd.f32 %v2212, %v2508
      %v2658 = vadd.f32 %v2213, %v2606
      %v2659 = vadd.f32 %v2214, %v2512
      %v2660 = vadd.f32 %v2215, %v2514
      %v2661 = vadd.f32 %v2216, %v2611
      %v2662 = vadd.f32 %v2217, %v2516
      %v2663 = vadd.f32 %v2218, %v2518
      %v2664 = vadd.f32 %v2219, %v2614
      %v2665 = vld [vmem:[%s3] ss:$2 sm:$0x7]
      %v2667 = vlaneseq
      %v2668 = vshrl.u32 %v2667, 7
      %v2669 = vsub.s32 0, %v2668
      %v2670 = vrot.slane %v2665, %v2669
      %v2671 = vlaneseq
      %v2672 = vshrl.u32 %v2671, 7
      %v2673 = vsub.s32 1, %v2672
      %v2674 = vrot.slane %v2665, %v2673
      %v2675 = vlaneseq
      %v2676 = vshrl.u32 %v2675, 7
      %v2677 = vsub.s32 2, %v2676
      %v2678 = vrot.slane %v2665, %v2677
      %v2682 = vadd.f32 %v2617, %v2670
      %v2683 = vadd.f32 %v2618, %v2674
      %v2684 = vadd.f32 %v2619, %v2678
      %v2685 = vadd.f32 %v2620, %v2670
      %v2686 = vadd.f32 %v2621, %v2674
      %v2687 = vadd.f32 %v2622, %v2678
      %v2688 = vadd.f32 %v2623, %v2670
      %v2689 = vadd.f32 %v2624, %v2674
      %v2690 = vadd.f32 %v2625, %v2678
      %v2691 = vadd.f32 %v2626, %v2670
      %v2692 = vadd.f32 %v2627, %v2674
      %v2693 = vadd.f32 %v2628, %v2678
      %v2694 = vadd.f32 %v2629, %v2670
      %v2695 = vadd.f32 %v2630, %v2674
      %v2696 = vadd.f32 %v2631, %v2678
      %v2697 = vadd.f32 %v2632, %v2670
      %v2698 = vadd.f32 %v2633, %v2674
      %v2699 = vadd.f32 %v2634, %v2678
      %v2700 = vadd.f32 %v2635, %v2670
      %v2701 = vadd.f32 %v2636, %v2674
      %v2702 = vadd.f32 %v2637, %v2678
      %v2703 = vadd.f32 %v2638, %v2670
      %v2704 = vadd.f32 %v2639, %v2674
      %v2705 = vadd.f32 %v2640, %v2678
      %v2706 = vadd.f32 %v2641, %v2670
      %v2707 = vadd.f32 %v2642, %v2674
      %v2708 = vadd.f32 %v2643, %v2678
      %v2709 = vadd.f32 %v2644, %v2670
      %v2710 = vadd.f32 %v2645, %v2674
      %v2711 = vadd.f32 %v2646, %v2678
      %v2712 = vadd.f32 %v2647, %v2670
      %v2713 = vadd.f32 %v2648, %v2674
      %v2714 = vadd.f32 %v2649, %v2678
      %v2715 = vadd.f32 %v2650, %v2670
      %v2716 = vadd.f32 %v2651, %v2674
      %v2717 = vadd.f32 %v2652, %v2678
      %v2718 = vadd.f32 %v2653, %v2670
      %v2719 = vadd.f32 %v2654, %v2674
      %v2720 = vadd.f32 %v2655, %v2678
      %v2721 = vadd.f32 %v2656, %v2670
      %v2722 = vadd.f32 %v2657, %v2674
      %v2723 = vadd.f32 %v2658, %v2678
      %v2724 = vadd.f32 %v2659, %v2670
      %v2725 = vadd.f32 %v2660, %v2674
      %v2726 = vadd.f32 %v2661, %v2678
      %v2727 = vadd.f32 %v2662, %v2670
      %v2728 = vadd.f32 %v2663, %v2674
      %v2729 = vadd.f32 %v2664, %v2678
      %v2730 = vmax.f32 %v2682, 0.0
      %v2731 = vmax.f32 %v2683, 0.0
      %v2732 = vmax.f32 %v2684, 0.0
      %v2733 = vmax.f32 %v2685, 0.0
      %v2734 = vmax.f32 %v2686, 0.0
      %v2735 = vmax.f32 %v2687, 0.0
      %v2736 = vmax.f32 %v2688, 0.0
      %v2737 = vmax.f32 %v2689, 0.0
      %v2738 = vmax.f32 %v2690, 0.0
      %v2739 = vmax.f32 %v2691, 0.0
      %v2740 = vmax.f32 %v2692, 0.0
      %v2741 = vmax.f32 %v2693, 0.0
      %v2742 = vmax.f32 %v2694, 0.0
      %v2743 = vmax.f32 %v2695, 0.0
      %v2744 = vmax.f32 %v2696, 0.0
      %v2745 = vmax.f32 %v2697, 0.0
      %v2746 = vmax.f32 %v2698, 0.0
      %v2747 = vmax.f32 %v2699, 0.0
      %v2748 = vmax.f32 %v2700, 0.0
      %v2749 = vmax.f32 %v2701, 0.0
      %v2750 = vmax.f32 %v2702, 0.0
      %v2751 = vmax.f32 %v2703, 0.0
      %v2752 = vmax.f32 %v2704, 0.0
      %v2753 = vmax.f32 %v2705, 0.0
      %v2754 = vmax.f32 %v2706, 0.0
      %v2755 = vmax.f32 %v2707, 0.0
      %v2756 = vmax.f32 %v2708, 0.0
      %v2757 = vmax.f32 %v2709, 0.0
      %v2758 = vmax.f32 %v2710, 0.0
      %v2759 = vmax.f32 %v2711, 0.0
      %v2760 = vmax.f32 %v2712, 0.0
      %v2761 = vmax.f32 %v2713, 0.0
      %v2762 = vmax.f32 %v2714, 0.0
      %v2763 = vmax.f32 %v2715, 0.0
      %v2764 = vmax.f32 %v2716, 0.0
      %v2765 = vmax.f32 %v2717, 0.0
      %v2766 = vmax.f32 %v2718, 0.0
      %v2767 = vmax.f32 %v2719, 0.0
      %v2768 = vmax.f32 %v2720, 0.0
      %v2769 = vmax.f32 %v2721, 0.0
      %v2770 = vmax.f32 %v2722, 0.0
      %v2771 = vmax.f32 %v2723, 0.0
      %v2772 = vmax.f32 %v2724, 0.0
      %v2773 = vmax.f32 %v2725, 0.0
      %v2774 = vmax.f32 %v2726, 0.0
      %v2775 = vmax.f32 %v2727, 0.0
      %v2776 = vmax.f32 %v2728, 0.0
      %v2777 = vmax.f32 %v2729, 0.0
      %v2778 = vlaneseq
      %v2779 = vshrl.u32 %v2778, 7
      %v2780 = vadd.s32 %v2779, 8
      %v2781 = vadd.s32 %v2779, 16
      %v2782 = vadd.s32 %v2779, 24
      %v2783 = vadd.s32 %v2779, 32
      %v2784 = vadd.s32 %v2779, 40
      %v2785 = vadd.s32 %v2779, 48
      %v2786 = vadd.s32 %v2779, 56
      %v2787 = vadd.s32 %v2779, 64
      %v2788 = vadd.s32 %v2779, 72
      %v2789 = vadd.s32 %v2779, 80
      %v2790 = vadd.s32 %v2779, 88
      %v2791 = vadd.s32 %v2779, 96
      %v2792 = vadd.s32 %v2779, 104
      %v2793 = vadd.s32 %v2779, 112
      %v2794 = vadd.s32 %v2779, 120
      %v2795 = vlaneseq
      %v2796 = vand.u32 %v2795, 127
      %v2797 = vadd.s32 %v2796, 128
      %v2798 = vadd.s32 %v2796, 256
      %vm2799 = vcmp.ge.s32.totalorder %v2796, 0
      %vm2800 = vcmp.ge.s32.totalorder %v2797, 0
      %vm2801 = vcmp.ge.s32.totalorder %v2798, 0
      %vm2802 = vcmp.lt.s32.totalorder %v2796, 128
      %vm2803 = vcmp.lt.s32.totalorder %v2797, 128
      %vm2804 = vcmp.lt.s32.totalorder %v2798, 128
      %vm2805 = vmand %vm2799, %vm2802
      %vm2806 = vmand %vm2800, %vm2803
      %vm2807 = vmand %vm2801, %vm2804
      %v2808 = vsel %vm2805, 126, 0
      %v2809 = vsel %vm2806, 126, 0
      %v2810 = vsel %vm2807, 126, 0
      %vm2811 = vcmp.ge.s32.totalorder %v2796, 128
      %vm2812 = vcmp.ge.s32.totalorder %v2797, 128
      %vm2813 = vcmp.ge.s32.totalorder %v2798, 128
      %vm2814 = vcmp.lt.s32.totalorder %v2796, 256
      %vm2815 = vcmp.lt.s32.totalorder %v2797, 256
      %vm2816 = vcmp.lt.s32.totalorder %v2798, 256
      %vm2817 = vmand %vm2811, %vm2814
      %vm2818 = vmand %vm2812, %vm2815
      %vm2819 = vmand %vm2813, %vm2816
      %v2820 = vsel %vm2817, 125, %v2808
      %v2821 = vsel %vm2818, 125, %v2809
      %v2822 = vsel %vm2819, 125, %v2810
      %vm2823 = vcmp.ge.s32.totalorder %v2796, 256
      %vm2824 = vcmp.ge.s32.totalorder %v2797, 256
      %vm2825 = vcmp.ge.s32.totalorder %v2798, 256
      %vm2826 = vcmp.lt.s32.totalorder %v2796, 384
      %vm2827 = vcmp.lt.s32.totalorder %v2797, 384
      %vm2828 = vcmp.lt.s32.totalorder %v2798, 384
      %vm2829 = vmand %vm2823, %vm2826
      %vm2830 = vmand %vm2824, %vm2827
      %vm2831 = vmand %vm2825, %vm2828
      %v2832 = vsel %vm2829, 124, %v2820
      %v2833 = vsel %vm2830, 124, %v2821
      %v2834 = vsel %vm2831, 124, %v2822
      %vm2835 = vcmp.lt.s32.totalorder %v2779, %v2832
      %vm2836 = vcmp.lt.s32.totalorder %v2779, %v2833
      %vm2837 = vcmp.lt.s32.totalorder %v2779, %v2834
      %vm2838 = vcmp.lt.s32.totalorder %v2780, %v2832
      %vm2839 = vcmp.lt.s32.totalorder %v2780, %v2833
      %vm2840 = vcmp.lt.s32.totalorder %v2780, %v2834
      %vm2841 = vcmp.lt.s32.totalorder %v2781, %v2832
      %vm2842 = vcmp.lt.s32.totalorder %v2781, %v2833
      %vm2843 = vcmp.lt.s32.totalorder %v2781, %v2834
      %vm2844 = vcmp.lt.s32.totalorder %v2782, %v2832
      %vm2845 = vcmp.lt.s32.totalorder %v2782, %v2833
      %vm2846 = vcmp.lt.s32.totalorder %v2782, %v2834
      %vm2847 = vcmp.lt.s32.totalorder %v2783, %v2832
      %vm2848 = vcmp.lt.s32.totalorder %v2783, %v2833
      %vm2849 = vcmp.lt.s32.totalorder %v2783, %v2834
      %vm2850 = vcmp.lt.s32.totalorder %v2784, %v2832
      %vm2851 = vcmp.lt.s32.totalorder %v2784, %v2833
      %vm2852 = vcmp.lt.s32.totalorder %v2784, %v2834
      %vm2853 = vcmp.lt.s32.totalorder %v2785, %v2832
      %vm2854 = vcmp.lt.s32.totalorder %v2785, %v2833
      %vm2855 = vcmp.lt.s32.totalorder %v2785, %v2834
      %vm2856 = vcmp.lt.s32.totalorder %v2786, %v2832
      %vm2857 = vcmp.lt.s32.totalorder %v2786, %v2833
      %vm2858 = vcmp.lt.s32.totalorder %v2786, %v2834
      %vm2859 = vcmp.lt.s32.totalorder %v2787, %v2832
      %vm2860 = vcmp.lt.s32.totalorder %v2787, %v2833
      %vm2861 = vcmp.lt.s32.totalorder %v2787, %v2834
      %vm2862 = vcmp.lt.s32.totalorder %v2788, %v2832
      %vm2863 = vcmp.lt.s32.totalorder %v2788, %v2833
      %vm2864 = vcmp.lt.s32.totalorder %v2788, %v2834
      %vm2865 = vcmp.lt.s32.totalorder %v2789, %v2832
      %vm2866 = vcmp.lt.s32.totalorder %v2789, %v2833
      %vm2867 = vcmp.lt.s32.totalorder %v2789, %v2834
      %vm2868 = vcmp.lt.s32.totalorder %v2790, %v2832
      %vm2869 = vcmp.lt.s32.totalorder %v2790, %v2833
      %vm2870 = vcmp.lt.s32.totalorder %v2790, %v2834
      %vm2871 = vcmp.lt.s32.totalorder %v2791, %v2832
      %vm2872 = vcmp.lt.s32.totalorder %v2791, %v2833
      %vm2873 = vcmp.lt.s32.totalorder %v2791, %v2834
      %vm2874 = vcmp.lt.s32.totalorder %v2792, %v2832
      %vm2875 = vcmp.lt.s32.totalorder %v2792, %v2833
      %vm2876 = vcmp.lt.s32.totalorder %v2792, %v2834
      %vm2877 = vcmp.lt.s32.totalorder %v2793, %v2832
      %vm2878 = vcmp.lt.s32.totalorder %v2793, %v2833
      %vm2879 = vcmp.lt.s32.totalorder %v2793, %v2834
      %vm2880 = vcmp.lt.s32.totalorder %v2794, %v2832
      %vm2881 = vcmp.lt.s32.totalorder %v2794, %v2833
      %vm2882 = vcmp.lt.s32.totalorder %v2794, %v2834
      %v2883 = vsel %vm2835, %v2730, -inf
      %v2884 = vsel %vm2836, %v2731, -inf
      %v2885 = vsel %vm2837, %v2732, -inf
      %v2886 = vsel %vm2838, %v2733, -inf
      %v2887 = vsel %vm2839, %v2734, -inf
      %v2888 = vsel %vm2840, %v2735, -inf
      %v2889 = vsel %vm2841, %v2736, -inf
      %v2890 = vsel %vm2842, %v2737, -inf
      %v2891 = vsel %vm2843, %v2738, -inf
      %v2892 = vsel %vm2844, %v2739, -inf
      %v2893 = vsel %vm2845, %v2740, -inf
      %v2894 = vsel %vm2846, %v2741, -inf
      %v2895 = vsel %vm2847, %v2742, -inf
      %v2896 = vsel %vm2848, %v2743, -inf
      %v2897 = vsel %vm2849, %v2744, -inf
      %v2898 = vsel %vm2850, %v2745, -inf
      %v2899 = vsel %vm2851, %v2746, -inf
      %v2900 = vsel %vm2852, %v2747, -inf
      %v2901 = vsel %vm2853, %v2748, -inf
      %v2902 = vsel %vm2854, %v2749, -inf
      %v2903 = vsel %vm2855, %v2750, -inf
      %v2904 = vsel %vm2856, %v2751, -inf
      %v2905 = vsel %vm2857, %v2752, -inf
      %v2906 = vsel %vm2858, %v2753, -inf
      %v2907 = vsel %vm2859, %v2754, -inf
      %v2908 = vsel %vm2860, %v2755, -inf
      %v2909 = vsel %vm2861, %v2756, -inf
      %v2910 = vsel %vm2862, %v2757, -inf
      %v2911 = vsel %vm2863, %v2758, -inf
      %v2912 = vsel %vm2864, %v2759, -inf
      %v2913 = vsel %vm2865, %v2760, -inf
      %v2914 = vsel %vm2866, %v2761, -inf
      %v2915 = vsel %vm2867, %v2762, -inf
      %v2916 = vsel %vm2868, %v2763, -inf
      %v2917 = vsel %vm2869, %v2764, -inf
      %v2918 = vsel %vm2870, %v2765, -inf
      %v2919 = vsel %vm2871, %v2766, -inf
      %v2920 = vsel %vm2872, %v2767, -inf
      %v2921 = vsel %vm2873, %v2768, -inf
      %v2922 = vsel %vm2874, %v2769, -inf
      %v2923 = vsel %vm2875, %v2770, -inf
      %v2924 = vsel %vm2876, %v2771, -inf
      %v2925 = vsel %vm2877, %v2772, -inf
      %v2926 = vsel %vm2878, %v2773, -inf
      %v2927 = vsel %vm2879, %v2774, -inf
      %v2928 = vsel %vm2880, %v2775, -inf
      %v2929 = vsel %vm2881, %v2776, -inf
      %v2930 = vsel %vm2882, %v2777, -inf
      %v2931 = vmax.f32 %v2883, %v2889
      %v2932 = vmax.f32 %v2886, %v2892
      %v2933 = vmax.f32 %v2931, %v2895
      %v2934 = vmax.f32 %v2932, %v2898
      %v2935 = vmax.f32 %v2933, %v2901
      %v2936 = vmax.f32 %v2934, %v2904
      %v2937 = vmax.f32 %v2935, %v2907
      %v2938 = vmax.f32 %v2936, %v2910
      %v2939 = vmax.f32 %v2937, %v2913
      %v2940 = vmax.f32 %v2938, %v2916
      %v2941 = vmax.f32 %v2939, %v2919
      %v2942 = vmax.f32 %v2940, %v2922
      %v2943 = vmax.f32 %v2941, %v2925
      %v2944 = vmax.f32 %v2942, %v2928
      %v2945 = vmax.f32 %v2943, %v2944
      %v2946 = vrot.slane %v2945, 4
      %v2947 = vmax.f32 %v2945, %v2946
      %v2948 = vrot.slane %v2947, 2
      %v2949 = vmax.f32 %v2947, %v2948
      %v2950 = vrot.slane %v2949, 1
      %v2951 = vmax.f32 %v2949, %v2950
      %v2952 = vmax.f32 %v2884, %v2890
      %v2953 = vmax.f32 %v2887, %v2893
      %v2954 = vmax.f32 %v2952, %v2896
      %v2955 = vmax.f32 %v2953, %v2899
      %v2956 = vmax.f32 %v2954, %v2902
      %v2957 = vmax.f32 %v2955, %v2905
      %v2958 = vmax.f32 %v2956, %v2908
      %v2959 = vmax.f32 %v2957, %v2911
      %v2960 = vmax.f32 %v2958, %v2914
      %v2961 = vmax.f32 %v2959, %v2917
      %v2962 = vmax.f32 %v2960, %v2920
      %v2963 = vmax.f32 %v2961, %v2923
      %v2964 = vmax.f32 %v2962, %v2926
      %v2965 = vmax.f32 %v2963, %v2929
      %v2966 = vmax.f32 %v2964, %v2965
      %v2967 = vrot.slane %v2966, 4
      %v2968 = vmax.f32 %v2966, %v2967
      %v2969 = vrot.slane %v2968, 2
      %v2970 = vmax.f32 %v2968, %v2969
      %v2971 = vrot.slane %v2970, 1
      %v2972 = vmax.f32 %v2970, %v2971
      %v2973 = vmax.f32 %v2885, %v2891
      %v2974 = vmax.f32 %v2888, %v2894
      %v2975 = vmax.f32 %v2973, %v2897
      %v2976 = vmax.f32 %v2974, %v2900
      %v2977 = vmax.f32 %v2975, %v2903
      %v2978 = vmax.f32 %v2976, %v2906
      %v2979 = vmax.f32 %v2977, %v2909
      %v2980 = vmax.f32 %v2978, %v2912
      %v2981 = vmax.f32 %v2979, %v2915
      %v2982 = vmax.f32 %v2980, %v2918
      %v2983 = vmax.f32 %v2981, %v2921
      %v2984 = vmax.f32 %v2982, %v2924
      %v2985 = vmax.f32 %v2983, %v2927
      %v2986 = vmax.f32 %v2984, %v2930
      %v2987 = vmax.f32 %v2985, %v2986
      %v2988 = vrot.slane %v2987, 4
      %v2989 = vmax.f32 %v2987, %v2988
      %v2990 = vrot.slane %v2989, 2
      %v2991 = vmax.f32 %v2989, %v2990
      %v2992 = vrot.slane %v2991, 1
      %v2993 = vmax.f32 %v2991, %v2992
      %s2994 = scalar_lea.vmem %s3, 1
      %v2995 = vld [vmem:[%s2994] ss:$2 sm:$0x7]
      %v2997 = vlaneseq
      %v2998 = vshrl.u32 %v2997, 7
      %v2999 = vsub.s32 0, %v2998
      %v3000 = vrot.slane %v2995, %v2999
      %v3001 = vlaneseq
      %v3002 = vshrl.u32 %v3001, 7
      %v3003 = vsub.s32 1, %v3002
      %v3004 = vrot.slane %v2995, %v3003
      %v3005 = vlaneseq
      %v3006 = vshrl.u32 %v3005, 7
      %v3007 = vsub.s32 2, %v3006
      %v3008 = vrot.slane %v2995, %v3007
      %v3012 = vmul.f32 %v2951, %v3000
      %v3013 = vmul.f32 %v2972, %v3004
      %v3014 = vmul.f32 %v2993, %v3008
      %vm3015 = vcmask 1040384
      %v3016 = vsel %vm3015, %v3012, 0.0
      %v3017 = vsel %vm3015, %v3013, 0.0
      %v3018 = vadd.f32 %v3016, %v3017
      %v3019 = vsel %vm3015, %v3014, 0.0
      %v3020 = vadd.f32 %v3018, %v3019
      %3021 = vadd.xlane.f32.xlu0 %v3020
      %v3022 = vpop.xlane.xlu0 %3021
      %s3023 = sld [smem:[#allocation2]]
      %v3024 = vstv %s3023
      %v3025 = vadd.f32 %v3022, %v3024
      %v3026 = vlaneseq
      %v3027 = vshrl.u32 %v3026, 7
      %v3028 = vsub.s32 0, %v3027
      %v3029 = vrot.slane %v3025, %v3028
      %3030 = vst [vmem:[%s223] sm:$0xff] %v3029
      %p3031 = scmp.lt.s32.totalorder %s17, 1
      %s3032 = scalar_select %p3031, %s17, 1
      %s3033 = smul.addr %s3032, 8
      %s3034 = scalar_lea.vmem %s5, %s3033
      // Predicated region
      $region41: #{bert_textcnn_forward.1} parent=39 // pred_check
        %p3035 = pneg %p145
      $region42: #{bert_textcnn_forward.1} parent=39 // pred_check_branch
        %3037 = sbr.rel (%p3035) target = $region44
      $region43: #{bert_textcnn_forward.1} parent=39 // pred_region
        _
      $region44: #{bert_textcnn_forward.1} parent=39 // pred_fallthru
        _
    $region40: #{bert_textcnn_forward.1} parent=5 // pred_fallthru
      _
    %p3038 = scmp.le.s32.totalorder 2, %s12
    // Predicated region
    $region45: #{bert_textcnn_forward.1} parent=5 // pred_check
      %p3039 = pneg %p3038
    $region46: #{bert_textcnn_forward.1} parent=5 // pred_check_branch
      %3041 = sbr.rel (%p3039) target = $region48
    $region47: #{bert_textcnn_forward.1} parent=5 // pred_region
      %s3042 = ssub.s32 %s12, 2
      // Predicated region
      $region49: #{bert_textcnn_forward.1} parent=47 // pred_check
        %p3043 = pneg %p151
      $region50: #{bert_textcnn_forward.1} parent=47 // pred_check_branch
        %3045 = sbr.rel (%p3043) target = $region52
      $region51: #{bert_textcnn_forward.1} parent=47 // pred_region
        %p3046 = scmp.lt.s32.totalorder %s18, 1
        %s3047 = scalar_select %p3046, %s18, 1
        %s3048 = smul.addr %s3047, 8
        %s3049 = scalar_lea.vmem %s5, %s3048
      $region52: #{bert_textcnn_forward.1} parent=47 // pred_fallthru
        _
    $region48: #{bert_textcnn_forward.1} parent=5 // pred_fallthru
      _
  $region6: #{bert_textcnn_forward.1} parent=0 // loop_footer
    %s16 = sadd.s32 1, %s12
  $region7: #{bert_textcnn_forward.1} parent=0 // loop_footer_branch
    %11 = sbr.rel target = $region3
  $region8: #{bert_textcnn_forward.1} parent=0 // loop_exit
    _

</llo_original>
